<compile_context>
chip_gen: v7x
topology: tpu7x:2x2x1
jax: 0.10.0
libtpu: 0.0.40
codegen_flags: <defaults>
</compile_context>

<pallas_src>
import functools

import jax
import jax.numpy as jnp
import numpy as np
from jax import lax
from jax.experimental import pallas as pl
from jax.experimental.pallas import tpu as pltpu


def _encoder_layer_kernel(num_heads, fused_qkv, *refs):
    # Inputs: [x] (self-attn) or [q, k, v], then the 12 replicated weights/biases,
    # then out_ref, attn_ref, and the bf16 context scratch.
    if fused_qkv:
        x_ref = refs[0]
        rest = refs[1:]
        k_ref = v_ref = x_ref
    else:
        x_ref, k_ref, v_ref = refs[:3]
        rest = refs[3:]
    (wqkv_ref, bqkv_ref, wo_ref, bo_ref,
     g1_ref, be1_ref, w1_ref, b1_ref, w2_ref, b2_ref, g2_ref, be2_ref,
     out_ref, attn_ref, ctx_ref) = rest

    BB, S, E = x_ref.shape          # batch shard, seq, embed
    M = BB * S                      # rows for all row-wise matmuls
    d = E // num_heads
    scaling = 1.0 / float(np.sqrt(d))

    # Residual source (the query) stays fp32.
    x = x_ref[...].astype(jnp.float32).reshape(M, E)

    # --- fused QKV projection: bf16 operands, fp32 accumulation ---
    wqkv = wqkv_ref[...]            # (E, 3E) bf16, column blocks [Q | K | V]
    bqkv = bqkv_ref[...]            # (1, 3E) f32
    if fused_qkv:
        qkv = jnp.dot(x.astype(jnp.bfloat16), wqkv,
                      preferred_element_type=jnp.float32) + bqkv
        Q, K, V = qkv[:, :E], qkv[:, E:2 * E], qkv[:, 2 * E:]
    else:
        kx = k_ref[...].astype(jnp.bfloat16).reshape(M, E)
        vx = v_ref[...].astype(jnp.bfloat16).reshape(M, E)
        Q = jnp.dot(x.astype(jnp.bfloat16), wqkv[:, :E],
                    preferred_element_type=jnp.float32) + bqkv[:, :E]
        K = jnp.dot(kx, wqkv[:, E:2 * E],
                    preferred_element_type=jnp.float32) + bqkv[:, E:2 * E]
        V = jnp.dot(vx, wqkv[:, 2 * E:],
                    preferred_element_type=jnp.float32) + bqkv[:, 2 * E:]

    # --- per-head attention, batched over the batch shard (single leading batch dim).
    # Context heads go straight into lane slices of the bf16 scratch: no concatenate.
    attn_acc = jnp.zeros((BB, S, S), jnp.float32)
    for h in range(num_heads):
        sl = slice(h * d, (h + 1) * d)
        qh = Q[:, sl].reshape(BB, S, d).astype(jnp.bfloat16)
        kh = K[:, sl].reshape(BB, S, d).astype(jnp.bfloat16)
        vh = V[:, sl].reshape(BB, S, d).astype(jnp.bfloat16)
        scores = jnp.einsum("bqd,bkd->bqk", qh, kh,
                            preferred_element_type=jnp.float32) * scaling
        m = jnp.max(scores, axis=-1, keepdims=True)
        p = jnp.exp(scores - m)
        p = p * pl.reciprocal(jnp.sum(p, axis=-1, keepdims=True), approx=True)
        attn_acc = attn_acc + p
        ctx_h = jnp.einsum("bqk,bkd->bqd", p.astype(jnp.bfloat16), vh,
                           preferred_element_type=jnp.float32)
        ctx_ref[:, sl] = ctx_h.reshape(M, d).astype(jnp.bfloat16)

    # PyTorch default average_attn_weights=True.
    attn_ref[...] = attn_acc * (1.0 / num_heads)

    # --- single fused output projection ---
    attn_out = jnp.dot(ctx_ref[...], wo_ref[...],
                       preferred_element_type=jnp.float32) + bo_ref[...]

    def layer_norm(v32, g, b):
        mu = jnp.mean(v32, axis=-1, keepdims=True)
        var = jnp.mean(jnp.square(v32 - mu), axis=-1, keepdims=True)
        return (v32 - mu) * lax.rsqrt(var + 1e-5) * g + b

    # --- residual + norm1 (dropout1 identity in eval) ---
    src = layer_norm(x + attn_out, g1_ref[...], be1_ref[...])

    # --- feed-forward: relu(src @ W1) @ W2 (dropout identity in eval) ---
    # NOTE: at production S/F, tile this over F (K-blocked accumulation) to respect
    # v7x's 64 MiB VMEM; unnecessary at these shapes.
    hidden = jnp.maximum(
        jnp.dot(src.astype(jnp.bfloat16), w1_ref[...],
                preferred_element_type=jnp.float32) + b1_ref[...], 0.0)
    ff = jnp.dot(hidden.astype(jnp.bfloat16), w2_ref[...],
                 preferred_element_type=jnp.float32) + b2_ref[...]

    # --- residual + norm2 (dropout2 identity in eval) ---
    out = layer_norm(src + ff, g2_ref[...], be2_ref[...])
    out_ref[...] = out.reshape(BB, S, E).astype(out_ref.dtype)


def my_transformer_encoder_layer(query, key, value, params, num_heads,
                                 batch_block=None):
    """query/key/value: [S, B, E] float32 (PyTorch seq-major layout).

    Returns (output [S, B, E], attn_weights [B, S, S])."""
    S, B, E = query.shape
    F = params["lin1_w"].shape[0]
    assert E % num_heads == 0

    # Self-attention fast path (the module's actual use): pass the activation once.
    fused_qkv = (key is query) and (value is query)

    # Fold as many batch elements as possible into each grid step (raises MXU
    # M-occupancy, amortizes ~600-cycle per-step overhead) while keeping >= 2
    # parallel steps when B >= 2 so both v7x TensorCores are used.
    if batch_block is None:
        batch_block = B // 2 if (B >= 2 and B % 2 == 0) else 1
    assert B % batch_block == 0
    num_blocks = B // batch_block

    # layout: kernel operates batch-major [B, S, E]
    qb = jnp.transpose(query, (1, 0, 2))
    if fused_qkv:
        acts = (qb,)
    else:
        acts = (qb, jnp.transpose(key, (1, 0, 2)), jnp.transpose(value, (1, 0, 2)))

    f32, bf16 = jnp.float32, jnp.bfloat16
    # Fused QKV weight: [in, 3*out] with column blocks [Q | K | V]; matmul weights bf16.
    wqkv = params["in_proj_w"].T.astype(bf16)            # (E, 3E)
    bqkv = params["in_proj_b"].reshape(1, 3 * E).astype(f32)
    wo = params["out_proj_w"].T.astype(bf16)             # (E, E)
    bo = params["out_proj_b"].reshape(1, E).astype(f32)
    w1 = params["lin1_w"].T.astype(bf16)                 # (E, F)
    b1 = params["lin1_b"].reshape(1, F).astype(f32)
    w2 = params["lin2_w"].T.astype(bf16)                 # (F, E)
    b2 = params["lin2_b"].reshape(1, E).astype(f32)
    g1 = params["ln1_g"].reshape(1, E).astype(f32)
    be1 = params["ln1_b"].reshape(1, E).astype(f32)
    g2 = params["ln2_g"].reshape(1, E).astype(f32)
    be2 = params["ln2_b"].reshape(1, E).astype(f32)
    weights = (wqkv, bqkv, wo, bo, g1, be1, w1, b1, w2, b2, g2, be2)

    def shard_spec(*tail):
        return pl.BlockSpec((batch_block,) + tail, lambda b: (b, 0, 0))

    def rep_spec(arr):
        # Replicated weights/biases (constant index_map). At production E/F these
        # should be single-buffered (pipeline_mode=pl.Buffered(1)) to save VMEM on
        # v7x; irrelevant at these shapes.
        return pl.BlockSpec(arr.shape, lambda b: (0,) * arr.ndim)

    in_specs = [shard_spec(S, E) for _ in acts] + [rep_spec(a) for a in weights]

    out, attn = pl.pallas_call(
        functools.partial(_encoder_layer_kernel, num_heads, fused_qkv),
        grid=(num_blocks,),
        in_specs=in_specs,
        out_specs=(shard_spec(S, E), shard_spec(S, S)),
        out_shape=(jax.ShapeDtypeStruct((B, S, E), f32),
                   jax.ShapeDtypeStruct((B, S, S), f32)),
        scratch_shapes=[pltpu.VMEM((batch_block * S, E), bf16)],
        compiler_params=pltpu.CompilerParams(
            dimension_semantics=("parallel",)),
    )(*acts, *weights)

    # back to PyTorch layout: output [S, B, E], attn weights [B, S, S]
    return jnp.transpose(out, (1, 0, 2)), attn


def reference(query, key, value, params, num_heads):
    """Pure-JAX fp32 reference replicating PyTorch MultiheadAttention + encoder layer."""
    S, B, E = query.shape
    d = E // num_heads
    scaling = 1.0 / np.sqrt(d)
    wq, wk, wv = (params["in_proj_w"][:E], params["in_proj_w"][E:2 * E],
                  params["in_proj_w"][2 * E:])
    bq, bk, bv = (params["in_proj_b"][:E], params["in_proj_b"][E:2 * E],
                  params["in_proj_b"][2 * E:])

    def ln(x, g, b):
        mu = jnp.mean(x, -1, keepdims=True)
        var = jnp.mean(jnp.square(x - mu), -1, keepdims=True)
        return (x - mu) / jnp.sqrt(var + 1e-5) * g + b

    qb = jnp.transpose(query, (1, 0, 2))
    kb = jnp.transpose(key, (1, 0, 2))
    vb = jnp.transpose(value, (1, 0, 2))
    Q = (qb @ wq.T + bq).reshape(B, S, num_heads, d).transpose(0, 2, 1, 3)
    K = (kb @ wk.T + bk).reshape(B, S, num_heads, d).transpose(0, 2, 1, 3)
    V = (vb @ wv.T + bv).reshape(B, S, num_heads, d).transpose(0, 2, 1, 3)
    scores = jnp.einsum("bhqd,bhkd->bhqk", Q, K) * scaling
    p = jax.nn.softmax(scores, axis=-1)
    ctx = jnp.einsum("bhqk,bhkd->bhqd", p, V).transpose(0, 2, 1, 3).reshape(B, S, E)
    attn_out = ctx @ params["out_proj_w"].T + params["out_proj_b"]
    src = ln(qb + attn_out, params["ln1_g"], params["ln1_b"])
    ff = jnp.maximum(src @ params["lin1_w"].T + params["lin1_b"], 0.0) @ \
        params["lin2_w"].T + params["lin2_b"]
    src = ln(src + ff, params["ln2_g"], params["ln2_b"])
    return jnp.transpose(src, (1, 0, 2)), jnp.mean(p, axis=1)


def make_params(key, E, F):
    ks = jax.random.split(key, 8)
    std = 0.05
    return {
        "in_proj_w": jax.random.normal(ks[0], (3 * E, E), jnp.float32) * std,
        "in_proj_b": jax.random.normal(ks[1], (3 * E,), jnp.float32) * std,
        "out_proj_w": jax.random.normal(ks[2], (E, E), jnp.float32) * std,
        "out_proj_b": jax.random.normal(ks[3], (E,), jnp.float32) * std,
        "lin1_w": jax.random.normal(ks[4], (F, E), jnp.float32) * std,
        "lin1_b": jax.random.normal(ks[5], (F,), jnp.float32) * std,
        "lin2_w": jax.random.normal(ks[6], (E, F), jnp.float32) * std,
        "lin2_b": jax.random.normal(ks[7], (E,), jnp.float32) * std,
        "ln1_g": jnp.ones((E,), jnp.float32),
        "ln1_b": jnp.zeros((E,), jnp.float32),
        "ln2_g": jnp.ones((E,), jnp.float32),
        "ln2_b": jnp.zeros((E,), jnp.float32),
    }


if __name__ == "__main__":
    # small shapes: seq=8, batch=4, embed_dim=32, num_heads=4, dim_feedforward=64
    # (batch=4 -> 2 grid shards of 2 batch elements each: batch folded into matmul M
    #  while still giving v7x's two TensorCores independent parallel steps)
    S, B, E, H, F = 8, 4, 32, 4, 64
    root = jax.random.PRNGKey(0)
    k_in, k_par, k_key, k_val = jax.random.split(root, 4)
    src = jax.random.normal(k_in, (S, B, E), jnp.float32)
    params = make_params(k_par, E, F)

    # --- self-attention use case of the original module: query is key is value ---
    out, attn_w = my_transformer_encoder_layer(src, src, src, params, H)
    out = jax.block_until_ready(out)
    attn_w = jax.block_until_ready(attn_w)
    ref_out, ref_w = reference(src, src, src, params, H)
    # tolerances account for bf16 matmul operands (fp32 accumulation)
    np.testing.assert_allclose(np.asarray(out), np.asarray(ref_out), atol=2e-2, rtol=2e-2)
    np.testing.assert_allclose(np.asarray(attn_w), np.asarray(ref_w), atol=5e-3, rtol=1e-2)

    # --- general path: distinct key / value tensors ---
    key_t = jax.random.normal(k_key, (S, B, E), jnp.float32)
    val_t = jax.random.normal(k_val, (S, B, E), jnp.float32)
    out2, attn_w2 = my_transformer_encoder_layer(src, key_t, val_t, params, H)
    out2 = jax.block_until_ready(out2)
    attn_w2 = jax.block_until_ready(attn_w2)
    ref_out2, ref_w2 = reference(src, key_t, val_t, params, H)
    np.testing.assert_allclose(np.asarray(out2), np.asarray(ref_out2), atol=2e-2, rtol=2e-2)
    np.testing.assert_allclose(np.asarray(attn_w2), np.asarray(ref_w2), atol=5e-3, rtol=1e-2)

    print("KERNEL_OK")
</pallas_src>

<mosaic_0001>
module attributes {stable_mosaic.version = 11 : i64} {
  func.func @_encoder_layer_kernel(%arg0: i32, %arg1: memref<2x8x32xf32, #tpu.memory_space<vmem>>, %arg2: memref<32x96xbf16, #tpu.memory_space<vmem>>, %arg3: memref<1x96xf32, #tpu.memory_space<vmem>>, %arg4: memref<32x32xbf16, #tpu.memory_space<vmem>>, %arg5: memref<1x32xf32, #tpu.memory_space<vmem>>, %arg6: memref<1x32xf32, #tpu.memory_space<vmem>>, %arg7: memref<1x32xf32, #tpu.memory_space<vmem>>, %arg8: memref<32x64xbf16, #tpu.memory_space<vmem>>, %arg9: memref<1x64xf32, #tpu.memory_space<vmem>>, %arg10: memref<64x32xbf16, #tpu.memory_space<vmem>>, %arg11: memref<1x32xf32, #tpu.memory_space<vmem>>, %arg12: memref<1x32xf32, #tpu.memory_space<vmem>>, %arg13: memref<1x32xf32, #tpu.memory_space<vmem>>, %arg14: memref<2x8x32xf32, #tpu.memory_space<vmem>>, %arg15: memref<2x8x8xf32, #tpu.memory_space<vmem>>, %arg16: memref<16x32xbf16, #tpu.memory_space<vmem>>) attributes {dimension_semantics = [#tpu.dimension_semantics<parallel>], iteration_bounds = array<i64: 2>, scalar_prefetch = 0 : i64, scratch_operands = 1 : i64, tpu.core_type = #tpu.core_type<tc>, window_params = [{transform_indices = @transform_0, window_bounds = array<i64: 2, 8, 32>}, {pipeline_mode = #tpu.pipeline_mode<synchronous>, transform_indices = @transform_1, window_bounds = array<i64: 32, 96>}, {pipeline_mode = #tpu.pipeline_mode<synchronous>, transform_indices = @transform_2, window_bounds = array<i64: 1, 96>}, {pipeline_mode = #tpu.pipeline_mode<synchronous>, transform_indices = @transform_3, window_bounds = array<i64: 32, 32>}, {pipeline_mode = #tpu.pipeline_mode<synchronous>, transform_indices = @transform_4, window_bounds = array<i64: 1, 32>}, {pipeline_mode = #tpu.pipeline_mode<synchronous>, transform_indices = @transform_5, window_bounds = array<i64: 1, 32>}, {pipeline_mode = #tpu.pipeline_mode<synchronous>, transform_indices = @transform_6, window_bounds = array<i64: 1, 32>}, {pipeline_mode = #tpu.pipeline_mode<synchronous>, transform_indices = @transform_7, window_bounds = array<i64: 32, 64>}, {pipeline_mode = #tpu.pipeline_mode<synchronous>, transform_indices = @transform_8, window_bounds = array<i64: 1, 64>}, {pipeline_mode = #tpu.pipeline_mode<synchronous>, transform_indices = @transform_9, window_bounds = array<i64: 64, 32>}, {pipeline_mode = #tpu.pipeline_mode<synchronous>, transform_indices = @transform_10, window_bounds = array<i64: 1, 32>}, {pipeline_mode = #tpu.pipeline_mode<synchronous>, transform_indices = @transform_11, window_bounds = array<i64: 1, 32>}, {pipeline_mode = #tpu.pipeline_mode<synchronous>, transform_indices = @transform_12, window_bounds = array<i64: 1, 32>}, {transform_indices = @transform_13, window_bounds = array<i64: 2, 8, 32>}, {transform_indices = @transform_14, window_bounds = array<i64: 2, 8, 8>}]} {
    %c0 = arith.constant 0 : index
    %c0_0 = arith.constant 0 : index
    %c0_1 = arith.constant 0 : index
    %0 = vector.load %arg1[%c0, %c0_0, %c0_1] : memref<2x8x32xf32, #tpu.memory_space<vmem>>, vector<2x8x32xf32>
    %1 = vector.shape_cast %0 : vector<2x8x32xf32> to vector<16x32xf32>
    %c0_2 = arith.constant 0 : index
    %c0_3 = arith.constant 0 : index
    %2 = vector.load %arg2[%c0_2, %c0_3] : memref<32x96xbf16, #tpu.memory_space<vmem>>, vector<32x96xbf16>
    %c0_4 = arith.constant 0 : index
    %c0_5 = arith.constant 0 : index
    %3 = vector.load %arg3[%c0_4, %c0_5] : memref<1x96xf32, #tpu.memory_space<vmem>>, vector<1x96xf32>
    %4 = arith.truncf %1 : vector<16x32xf32> to vector<16x32xbf16>
    %cst = arith.constant dense<0.000000e+00> : vector<16x96xf32>
    %5 = tpu.matmul %4, %2, %cst {dimension_numbers = #tpu.dot_dimension_numbers<[1], [0], [0], [1], [0, 0, 1, 1], [], []>} : vector<16x32xbf16>, vector<32x96xbf16>, vector<16x96xf32> -> vector<16x96xf32>
    %6 = vector.broadcast %3 : vector<1x96xf32> to vector<16x96xf32>
    %7 = arith.addf %5, %6 : vector<16x96xf32>
    %8 = vector.extract_strided_slice %7 {offsets = [0, 0], sizes = [16, 32], strides = [1, 1]} : vector<16x96xf32> to vector<16x32xf32>
    %9 = vector.extract_strided_slice %7 {offsets = [0, 32], sizes = [16, 32], strides = [1, 1]} : vector<16x96xf32> to vector<16x32xf32>
    %10 = vector.extract_strided_slice %7 {offsets = [0, 64], sizes = [16, 32], strides = [1, 1]} : vector<16x96xf32> to vector<16x32xf32>
    %cst_6 = arith.constant 0.000000e+00 : f32
    %11 = vector.broadcast %cst_6 : f32 to vector<2x8x8xf32>
    %12 = vector.extract_strided_slice %8 {offsets = [0, 0], sizes = [16, 8], strides = [1, 1]} : vector<16x32xf32> to vector<16x8xf32>
    %13 = vector.shape_cast %12 : vector<16x8xf32> to vector<2x8x8xf32>
    %14 = arith.truncf %13 : vector<2x8x8xf32> to vector<2x8x8xbf16>
    %15 = vector.extract_strided_slice %9 {offsets = [0, 0], sizes = [16, 8], strides = [1, 1]} : vector<16x32xf32> to vector<16x8xf32>
    %16 = vector.shape_cast %15 : vector<16x8xf32> to vector<2x8x8xf32>
    %17 = arith.truncf %16 : vector<2x8x8xf32> to vector<2x8x8xbf16>
    %18 = vector.extract_strided_slice %10 {offsets = [0, 0], sizes = [16, 8], strides = [1, 1]} : vector<16x32xf32> to vector<16x8xf32>
    %19 = vector.shape_cast %18 : vector<16x8xf32> to vector<2x8x8xf32>
    %20 = arith.truncf %19 : vector<2x8x8xf32> to vector<2x8x8xbf16>
    "tpu.trace_start"() <{level = 10 : i32, message = "bqd,bkd->bqk"}> : () -> ()
    %cst_7 = arith.constant dense<0.000000e+00> : vector<2x8x8xf32>
    %21 = tpu.matmul %14, %17, %cst_7 {dimension_numbers = #tpu.dot_dimension_numbers<[2], [2], [1], [1], [0, 0, 0, 1, 1, 1], [0], [0]>} : vector<2x8x8xbf16>, vector<2x8x8xbf16>, vector<2x8x8xf32> -> vector<2x8x8xf32>
    "tpu.trace_stop"() : () -> ()
    %cst_8 = arith.constant 0.353553385 : f32
    %22 = vector.broadcast %cst_8 : f32 to vector<2x8x8xf32>
    %23 = arith.mulf %21, %22 : vector<2x8x8xf32>
    %cst_9 = arith.constant dense<0xFF800000> : vector<2x8xf32>
    %24 = vector.multi_reduction <maximumf>, %23, %cst_9 [2] : vector<2x8x8xf32> to vector<2x8xf32>
    %25 = vector.shape_cast %24 : vector<2x8xf32> to vector<2x8x1xf32>
    %26 = vector.broadcast %25 : vector<2x8x1xf32> to vector<2x8x8xf32>
    %27 = arith.subf %23, %26 : vector<2x8x8xf32>
    %28 = math.exp %27 : vector<2x8x8xf32>
    %cst_10 = arith.constant dense<0.000000e+00> : vector<2x8xf32>
    %29 = vector.multi_reduction <add>, %28, %cst_10 [2] : vector<2x8x8xf32> to vector<2x8xf32>
    %30 = vector.shape_cast %29 : vector<2x8xf32> to vector<2x8x1xf32>
    %31 = tpu.reciprocal %30 {approx = true} : vector<2x8x1xf32> -> vector<2x8x1xf32>
    %32 = vector.broadcast %31 : vector<2x8x1xf32> to vector<2x8x8xf32>
    %33 = arith.mulf %28, %32 : vector<2x8x8xf32>
    %34 = arith.addf %11, %33 : vector<2x8x8xf32>
    %35 = arith.truncf %33 : vector<2x8x8xf32> to vector<2x8x8xbf16>
    "tpu.trace_start"() <{level = 10 : i32, message = "bqk,bkd->bqd"}> : () -> ()
    %cst_11 = arith.constant dense<0.000000e+00> : vector<2x8x8xf32>
    %36 = tpu.matmul %35, %20, %cst_11 {dimension_numbers = #tpu.dot_dimension_numbers<[2], [1], [1], [2], [0, 0, 0, 1, 1, 2], [0], [0]>} : vector<2x8x8xbf16>, vector<2x8x8xbf16>, vector<2x8x8xf32> -> vector<2x8x8xf32>
    "tpu.trace_stop"() : () -> ()
    %37 = vector.shape_cast %36 : vector<2x8x8xf32> to vector<16x8xf32>
    %38 = arith.truncf %37 : vector<16x8xf32> to vector<16x8xbf16>
    %c0_12 = arith.constant 0 : index
    %c0_13 = arith.constant 0 : index
    %39 = vector.load %arg16[%c0_12, %c0_13] : memref<16x32xbf16, #tpu.memory_space<vmem>>, vector<16x8xbf16>
    tpu.vector_store %arg16[%c0_12, %c0_13], %38 {strides = array<i32>} : memref<16x32xbf16, #tpu.memory_space<vmem>>, vector<16x8xbf16>,
    %40 = vector.extract_strided_slice %8 {offsets = [0, 8], sizes = [16, 8], strides = [1, 1]} : vector<16x32xf32> to vector<16x8xf32>
    %41 = vector.shape_cast %40 : vector<16x8xf32> to vector<2x8x8xf32>
    %42 = arith.truncf %41 : vector<2x8x8xf32> to vector<2x8x8xbf16>
    %43 = vector.extract_strided_slice %9 {offsets = [0, 8], sizes = [16, 8], strides = [1, 1]} : vector<16x32xf32> to vector<16x8xf32>
    %44 = vector.shape_cast %43 : vector<16x8xf32> to vector<2x8x8xf32>
    %45 = arith.truncf %44 : vector<2x8x8xf32> to vector<2x8x8xbf16>
    %46 = vector.extract_strided_slice %10 {offsets = [0, 8], sizes = [16, 8], strides = [1, 1]} : vector<16x32xf32> to vector<16x8xf32>
    %47 = vector.shape_cast %46 : vector<16x8xf32> to vector<2x8x8xf32>
    %48 = arith.truncf %47 : vector<2x8x8xf32> to vector<2x8x8xbf16>
    "tpu.trace_start"() <{level = 10 : i32, message = "bqd,bkd->bqk"}> : () -> ()
    %cst_14 = arith.constant dense<0.000000e+00> : vector<2x8x8xf32>
    %49 = tpu.matmul %42, %45, %cst_14 {dimension_numbers = #tpu.dot_dimension_numbers<[2], [2], [1], [1], [0, 0, 0, 1, 1, 1], [0], [0]>} : vector<2x8x8xbf16>, vector<2x8x8xbf16>, vector<2x8x8xf32> -> vector<2x8x8xf32>
    "tpu.trace_stop"() : () -> ()
    %cst_15 = arith.constant 0.353553385 : f32
    %50 = vector.broadcast %cst_15 : f32 to vector<2x8x8xf32>
    %51 = arith.mulf %49, %50 : vector<2x8x8xf32>
    %cst_16 = arith.constant dense<0xFF800000> : vector<2x8xf32>
    %52 = vector.multi_reduction <maximumf>, %51, %cst_16 [2] : vector<2x8x8xf32> to vector<2x8xf32>
    %53 = vector.shape_cast %52 : vector<2x8xf32> to vector<2x8x1xf32>
    %54 = vector.broadcast %53 : vector<2x8x1xf32> to vector<2x8x8xf32>
    %55 = arith.subf %51, %54 : vector<2x8x8xf32>
    %56 = math.exp %55 : vector<2x8x8xf32>
    %cst_17 = arith.constant dense<0.000000e+00> : vector<2x8xf32>
    %57 = vector.multi_reduction <add>, %56, %cst_17 [2] : vector<2x8x8xf32> to vector<2x8xf32>
    %58 = vector.shape_cast %57 : vector<2x8xf32> to vector<2x8x1xf32>
    %59 = tpu.reciprocal %58 {approx = true} : vector<2x8x1xf32> -> vector<2x8x1xf32>
    %60 = vector.broadcast %59 : vector<2x8x1xf32> to vector<2x8x8xf32>
    %61 = arith.mulf %56, %60 : vector<2x8x8xf32>
    %62 = arith.addf %34, %61 : vector<2x8x8xf32>
    %63 = arith.truncf %61 : vector<2x8x8xf32> to vector<2x8x8xbf16>
    "tpu.trace_start"() <{level = 10 : i32, message = "bqk,bkd->bqd"}> : () -> ()
    %cst_18 = arith.constant dense<0.000000e+00> : vector<2x8x8xf32>
    %64 = tpu.matmul %63, %48, %cst_18 {dimension_numbers = #tpu.dot_dimension_numbers<[2], [1], [1], [2], [0, 0, 0, 1, 1, 2], [0], [0]>} : vector<2x8x8xbf16>, vector<2x8x8xbf16>, vector<2x8x8xf32> -> vector<2x8x8xf32>
    "tpu.trace_stop"() : () -> ()
    %65 = vector.shape_cast %64 : vector<2x8x8xf32> to vector<16x8xf32>
    %66 = arith.truncf %65 : vector<16x8xf32> to vector<16x8xbf16>
    %c0_19 = arith.constant 0 : index
    %c8 = arith.constant 8 : index
    %67 = vector.load %arg16[%c0_19, %c8] : memref<16x32xbf16, #tpu.memory_space<vmem>>, vector<16x8xbf16>
    tpu.vector_store %arg16[%c0_19, %c8], %66 {strides = array<i32>} : memref<16x32xbf16, #tpu.memory_space<vmem>>, vector<16x8xbf16>,
    %68 = vector.extract_strided_slice %8 {offsets = [0, 16], sizes = [16, 8], strides = [1, 1]} : vector<16x32xf32> to vector<16x8xf32>
    %69 = vector.shape_cast %68 : vector<16x8xf32> to vector<2x8x8xf32>
    %70 = arith.truncf %69 : vector<2x8x8xf32> to vector<2x8x8xbf16>
    %71 = vector.extract_strided_slice %9 {offsets = [0, 16], sizes = [16, 8], strides = [1, 1]} : vector<16x32xf32> to vector<16x8xf32>
    %72 = vector.shape_cast %71 : vector<16x8xf32> to vector<2x8x8xf32>
    %73 = arith.truncf %72 : vector<2x8x8xf32> to vector<2x8x8xbf16>
    %74 = vector.extract_strided_slice %10 {offsets = [0, 16], sizes = [16, 8], strides = [1, 1]} : vector<16x32xf32> to vector<16x8xf32>
    %75 = vector.shape_cast %74 : vector<16x8xf32> to vector<2x8x8xf32>
    %76 = arith.truncf %75 : vector<2x8x8xf32> to vector<2x8x8xbf16>
    "tpu.trace_start"() <{level = 10 : i32, message = "bqd,bkd->bqk"}> : () -> ()
    %cst_20 = arith.constant dense<0.000000e+00> : vector<2x8x8xf32>
    %77 = tpu.matmul %70, %73, %cst_20 {dimension_numbers = #tpu.dot_dimension_numbers<[2], [2], [1], [1], [0, 0, 0, 1, 1, 1], [0], [0]>} : vector<2x8x8xbf16>, vector<2x8x8xbf16>, vector<2x8x8xf32> -> vector<2x8x8xf32>
    "tpu.trace_stop"() : () -> ()
    %cst_21 = arith.constant 0.353553385 : f32
    %78 = vector.broadcast %cst_21 : f32 to vector<2x8x8xf32>
    %79 = arith.mulf %77, %78 : vector<2x8x8xf32>
    %cst_22 = arith.constant dense<0xFF800000> : vector<2x8xf32>
    %80 = vector.multi_reduction <maximumf>, %79, %cst_22 [2] : vector<2x8x8xf32> to vector<2x8xf32>
    %81 = vector.shape_cast %80 : vector<2x8xf32> to vector<2x8x1xf32>
    %82 = vector.broadcast %81 : vector<2x8x1xf32> to vector<2x8x8xf32>
    %83 = arith.subf %79, %82 : vector<2x8x8xf32>
    %84 = math.exp %83 : vector<2x8x8xf32>
    %cst_23 = arith.constant dense<0.000000e+00> : vector<2x8xf32>
    %85 = vector.multi_reduction <add>, %84, %cst_23 [2] : vector<2x8x8xf32> to vector<2x8xf32>
    %86 = vector.shape_cast %85 : vector<2x8xf32> to vector<2x8x1xf32>
    %87 = tpu.reciprocal %86 {approx = true} : vector<2x8x1xf32> -> vector<2x8x1xf32>
    %88 = vector.broadcast %87 : vector<2x8x1xf32> to vector<2x8x8xf32>
    %89 = arith.mulf %84, %88 : vector<2x8x8xf32>
    %90 = arith.addf %62, %89 : vector<2x8x8xf32>
    %91 = arith.truncf %89 : vector<2x8x8xf32> to vector<2x8x8xbf16>
    "tpu.trace_start"() <{level = 10 : i32, message = "bqk,bkd->bqd"}> : () -> ()
    %cst_24 = arith.constant dense<0.000000e+00> : vector<2x8x8xf32>
    %92 = tpu.matmul %91, %76, %cst_24 {dimension_numbers = #tpu.dot_dimension_numbers<[2], [1], [1], [2], [0, 0, 0, 1, 1, 2], [0], [0]>} : vector<2x8x8xbf16>, vector<2x8x8xbf16>, vector<2x8x8xf32> -> vector<2x8x8xf32>
    "tpu.trace_stop"() : () -> ()
    %93 = vector.shape_cast %92 : vector<2x8x8xf32> to vector<16x8xf32>
    %94 = arith.truncf %93 : vector<16x8xf32> to vector<16x8xbf16>
    %c0_25 = arith.constant 0 : index
    %c16 = arith.constant 16 : index
    %95 = vector.load %arg16[%c0_25, %c16] : memref<16x32xbf16, #tpu.memory_space<vmem>>, vector<16x8xbf16>
    tpu.vector_store %arg16[%c0_25, %c16], %94 {strides = array<i32>} : memref<16x32xbf16, #tpu.memory_space<vmem>>, vector<16x8xbf16>,
    %96 = vector.extract_strided_slice %8 {offsets = [0, 24], sizes = [16, 8], strides = [1, 1]} : vector<16x32xf32> to vector<16x8xf32>
    %97 = vector.shape_cast %96 : vector<16x8xf32> to vector<2x8x8xf32>
    %98 = arith.truncf %97 : vector<2x8x8xf32> to vector<2x8x8xbf16>
    %99 = vector.extract_strided_slice %9 {offsets = [0, 24], sizes = [16, 8], strides = [1, 1]} : vector<16x32xf32> to vector<16x8xf32>
    %100 = vector.shape_cast %99 : vector<16x8xf32> to vector<2x8x8xf32>
    %101 = arith.truncf %100 : vector<2x8x8xf32> to vector<2x8x8xbf16>
    %102 = vector.extract_strided_slice %10 {offsets = [0, 24], sizes = [16, 8], strides = [1, 1]} : vector<16x32xf32> to vector<16x8xf32>
    %103 = vector.shape_cast %102 : vector<16x8xf32> to vector<2x8x8xf32>
    %104 = arith.truncf %103 : vector<2x8x8xf32> to vector<2x8x8xbf16>
    "tpu.trace_start"() <{level = 10 : i32, message = "bqd,bkd->bqk"}> : () -> ()
    %cst_26 = arith.constant dense<0.000000e+00> : vector<2x8x8xf32>
    %105 = tpu.matmul %98, %101, %cst_26 {dimension_numbers = #tpu.dot_dimension_numbers<[2], [2], [1], [1], [0, 0, 0, 1, 1, 1], [0], [0]>} : vector<2x8x8xbf16>, vector<2x8x8xbf16>, vector<2x8x8xf32> -> vector<2x8x8xf32>
    "tpu.trace_stop"() : () -> ()
    %cst_27 = arith.constant 0.353553385 : f32
    %106 = vector.broadcast %cst_27 : f32 to vector<2x8x8xf32>
    %107 = arith.mulf %105, %106 : vector<2x8x8xf32>
    %cst_28 = arith.constant dense<0xFF800000> : vector<2x8xf32>
    %108 = vector.multi_reduction <maximumf>, %107, %cst_28 [2] : vector<2x8x8xf32> to vector<2x8xf32>
    %109 = vector.shape_cast %108 : vector<2x8xf32> to vector<2x8x1xf32>
    %110 = vector.broadcast %109 : vector<2x8x1xf32> to vector<2x8x8xf32>
    %111 = arith.subf %107, %110 : vector<2x8x8xf32>
    %112 = math.exp %111 : vector<2x8x8xf32>
    %cst_29 = arith.constant dense<0.000000e+00> : vector<2x8xf32>
    %113 = vector.multi_reduction <add>, %112, %cst_29 [2] : vector<2x8x8xf32> to vector<2x8xf32>
    %114 = vector.shape_cast %113 : vector<2x8xf32> to vector<2x8x1xf32>
    %115 = tpu.reciprocal %114 {approx = true} : vector<2x8x1xf32> -> vector<2x8x1xf32>
    %116 = vector.broadcast %115 : vector<2x8x1xf32> to vector<2x8x8xf32>
    %117 = arith.mulf %112, %116 : vector<2x8x8xf32>
    %118 = arith.addf %90, %117 : vector<2x8x8xf32>
    %119 = arith.truncf %117 : vector<2x8x8xf32> to vector<2x8x8xbf16>
    "tpu.trace_start"() <{level = 10 : i32, message = "bqk,bkd->bqd"}> : () -> ()
    %cst_30 = arith.constant dense<0.000000e+00> : vector<2x8x8xf32>
    %120 = tpu.matmul %119, %104, %cst_30 {dimension_numbers = #tpu.dot_dimension_numbers<[2], [1], [1], [2], [0, 0, 0, 1, 1, 2], [0], [0]>} : vector<2x8x8xbf16>, vector<2x8x8xbf16>, vector<2x8x8xf32> -> vector<2x8x8xf32>
    "tpu.trace_stop"() : () -> ()
    %121 = vector.shape_cast %120 : vector<2x8x8xf32> to vector<16x8xf32>
    %122 = arith.truncf %121 : vector<16x8xf32> to vector<16x8xbf16>
    %c0_31 = arith.constant 0 : index
    %c24 = arith.constant 24 : index
    %123 = vector.load %arg16[%c0_31, %c24] : memref<16x32xbf16, #tpu.memory_space<vmem>>, vector<16x8xbf16>
    tpu.vector_store %arg16[%c0_31, %c24], %122 {strides = array<i32>} : memref<16x32xbf16, #tpu.memory_space<vmem>>, vector<16x8xbf16>,
    %cst_32 = arith.constant 2.500000e-01 : f32
    %124 = vector.broadcast %cst_32 : f32 to vector<2x8x8xf32>
    %125 = arith.mulf %118, %124 : vector<2x8x8xf32>
    %c0_33 = arith.constant 0 : index
    %c0_34 = arith.constant 0 : index
    %c0_35 = arith.constant 0 : index
    %126 = vector.load %arg15[%c0_33, %c0_34, %c0_35] : memref<2x8x8xf32, #tpu.memory_space<vmem>>, vector<2x8x8xf32>
    tpu.vector_store %arg15[%c0_33, %c0_34, %c0_35], %125 {strides = array<i32>} : memref<2x8x8xf32, #tpu.memory_space<vmem>>, vector<2x8x8xf32>,
    %c0_36 = arith.constant 0 : index
    %c0_37 = arith.constant 0 : index
    %127 = vector.load %arg16[%c0_36, %c0_37] : memref<16x32xbf16, #tpu.memory_space<vmem>>, vector<16x32xbf16>
    %c0_38 = arith.constant 0 : index
    %c0_39 = arith.constant 0 : index
    %128 = vector.load %arg4[%c0_38, %c0_39] : memref<32x32xbf16, #tpu.memory_space<vmem>>, vector<32x32xbf16>
    %cst_40 = arith.constant dense<0.000000e+00> : vector<16x32xf32>
    %129 = tpu.matmul %127, %128, %cst_40 {dimension_numbers = #tpu.dot_dimension_numbers<[1], [0], [0], [1], [0, 0, 1, 1], [], []>} : vector<16x32xbf16>, vector<32x32xbf16>, vector<16x32xf32> -> vector<16x32xf32>
    %c0_41 = arith.constant 0 : index
    %c0_42 = arith.constant 0 : index
    %130 = vector.load %arg5[%c0_41, %c0_42] : memref<1x32xf32, #tpu.memory_space<vmem>>, vector<1x32xf32>
    %131 = vector.broadcast %130 : vector<1x32xf32> to vector<16x32xf32>
    %132 = arith.addf %129, %131 : vector<16x32xf32>
    %133 = arith.addf %1, %132 : vector<16x32xf32>
    %c0_43 = arith.constant 0 : index
    %c0_44 = arith.constant 0 : index
    %134 = vector.load %arg6[%c0_43, %c0_44] : memref<1x32xf32, #tpu.memory_space<vmem>>, vector<1x32xf32>
    %c0_45 = arith.constant 0 : index
    %c0_46 = arith.constant 0 : index
    %135 = vector.load %arg7[%c0_45, %c0_46] : memref<1x32xf32, #tpu.memory_space<vmem>>, vector<1x32xf32>
    %cst_47 = arith.constant dense<0.000000e+00> : vector<16xf32>
    %136 = vector.multi_reduction <add>, %133, %cst_47 [1] : vector<16x32xf32> to vector<16xf32>
    %137 = vector.shape_cast %136 : vector<16xf32> to vector<16x1xf32>
    %cst_48 = arith.constant 3.200000e+01 : f32
    %138 = vector.broadcast %cst_48 : f32 to vector<16x1xf32>
    %139 = arith.divf %137, %138 : vector<16x1xf32>
    %140 = vector.broadcast %139 : vector<16x1xf32> to vector<16x32xf32>
    %141 = arith.subf %133, %140 : vector<16x32xf32>
    %142 = arith.mulf %141, %141 : vector<16x32xf32>
    %cst_49 = arith.constant dense<0.000000e+00> : vector<16xf32>
    %143 = vector.multi_reduction <add>, %142, %cst_49 [1] : vector<16x32xf32> to vector<16xf32>
    %144 = vector.shape_cast %143 : vector<16xf32> to vector<16x1xf32>
    %cst_50 = arith.constant 3.200000e+01 : f32
    %145 = vector.broadcast %cst_50 : f32 to vector<16x1xf32>
    %146 = arith.divf %144, %145 : vector<16x1xf32>
    %147 = vector.broadcast %139 : vector<16x1xf32> to vector<16x32xf32>
    %148 = arith.subf %133, %147 : vector<16x32xf32>
    %cst_51 = arith.constant 9.99999974E-6 : f32
    %149 = vector.broadcast %cst_51 : f32 to vector<16x1xf32>
    %150 = arith.addf %146, %149 : vector<16x1xf32>
    %151 = math.rsqrt %150 : vector<16x1xf32>
    %152 = vector.broadcast %151 : vector<16x1xf32> to vector<16x32xf32>
    %153 = arith.mulf %148, %152 : vector<16x32xf32>
    %154 = vector.broadcast %134 : vector<1x32xf32> to vector<16x32xf32>
    %155 = arith.mulf %153, %154 : vector<16x32xf32>
    %156 = vector.broadcast %135 : vector<1x32xf32> to vector<16x32xf32>
    %157 = arith.addf %155, %156 : vector<16x32xf32>
    %158 = arith.truncf %157 : vector<16x32xf32> to vector<16x32xbf16>
    %c0_52 = arith.constant 0 : index
    %c0_53 = arith.constant 0 : index
    %159 = vector.load %arg8[%c0_52, %c0_53] : memref<32x64xbf16, #tpu.memory_space<vmem>>, vector<32x64xbf16>
    %cst_54 = arith.constant dense<0.000000e+00> : vector<16x64xf32>
    %160 = tpu.matmul %158, %159, %cst_54 {dimension_numbers = #tpu.dot_dimension_numbers<[1], [0], [0], [1], [0, 0, 1, 1], [], []>} : vector<16x32xbf16>, vector<32x64xbf16>, vector<16x64xf32> -> vector<16x64xf32>
    %c0_55 = arith.constant 0 : index
    %c0_56 = arith.constant 0 : index
    %161 = vector.load %arg9[%c0_55, %c0_56] : memref<1x64xf32, #tpu.memory_space<vmem>>, vector<1x64xf32>
    %162 = vector.broadcast %161 : vector<1x64xf32> to vector<16x64xf32>
    %163 = arith.addf %160, %162 : vector<16x64xf32>
    %cst_57 = arith.constant 0.000000e+00 : f32
    %164 = vector.broadcast %cst_57 : f32 to vector<16x64xf32>
    %165 = arith.maximumf %163, %164 : vector<16x64xf32>
    %166 = arith.truncf %165 : vector<16x64xf32> to vector<16x64xbf16>
    %c0_58 = arith.constant 0 : index
    %c0_59 = arith.constant 0 : index
    %167 = vector.load %arg10[%c0_58, %c0_59] : memref<64x32xbf16, #tpu.memory_space<vmem>>, vector<64x32xbf16>
    %cst_60 = arith.constant dense<0.000000e+00> : vector<16x32xf32>
    %168 = tpu.matmul %166, %167, %cst_60 {dimension_numbers = #tpu.dot_dimension_numbers<[1], [0], [0], [1], [0, 0, 1, 1], [], []>} : vector<16x64xbf16>, vector<64x32xbf16>, vector<16x32xf32> -> vector<16x32xf32>
    %c0_61 = arith.constant 0 : index
    %c0_62 = arith.constant 0 : index
    %169 = vector.load %arg11[%c0_61, %c0_62] : memref<1x32xf32, #tpu.memory_space<vmem>>, vector<1x32xf32>
    %170 = vector.broadcast %169 : vector<1x32xf32> to vector<16x32xf32>
    %171 = arith.addf %168, %170 : vector<16x32xf32>
    %172 = arith.addf %157, %171 : vector<16x32xf32>
    %c0_63 = arith.constant 0 : index
    %c0_64 = arith.constant 0 : index
    %173 = vector.load %arg12[%c0_63, %c0_64] : memref<1x32xf32, #tpu.memory_space<vmem>>, vector<1x32xf32>
    %c0_65 = arith.constant 0 : index
    %c0_66 = arith.constant 0 : index
    %174 = vector.load %arg13[%c0_65, %c0_66] : memref<1x32xf32, #tpu.memory_space<vmem>>, vector<1x32xf32>
    %cst_67 = arith.constant dense<0.000000e+00> : vector<16xf32>
    %175 = vector.multi_reduction <add>, %172, %cst_67 [1] : vector<16x32xf32> to vector<16xf32>
    %176 = vector.shape_cast %175 : vector<16xf32> to vector<16x1xf32>
    %cst_68 = arith.constant 3.200000e+01 : f32
    %177 = vector.broadcast %cst_68 : f32 to vector<16x1xf32>
    %178 = arith.divf %176, %177 : vector<16x1xf32>
    %179 = vector.broadcast %178 : vector<16x1xf32> to vector<16x32xf32>
    %180 = arith.subf %172, %179 : vector<16x32xf32>
    %181 = arith.mulf %180, %180 : vector<16x32xf32>
    %cst_69 = arith.constant dense<0.000000e+00> : vector<16xf32>
    %182 = vector.multi_reduction <add>, %181, %cst_69 [1] : vector<16x32xf32> to vector<16xf32>
    %183 = vector.shape_cast %182 : vector<16xf32> to vector<16x1xf32>
    %cst_70 = arith.constant 3.200000e+01 : f32
    %184 = vector.broadcast %cst_70 : f32 to vector<16x1xf32>
    %185 = arith.divf %183, %184 : vector<16x1xf32>
    %186 = vector.broadcast %178 : vector<16x1xf32> to vector<16x32xf32>
    %187 = arith.subf %172, %186 : vector<16x32xf32>
    %cst_71 = arith.constant 9.99999974E-6 : f32
    %188 = vector.broadcast %cst_71 : f32 to vector<16x1xf32>
    %189 = arith.addf %185, %188 : vector<16x1xf32>
    %190 = math.rsqrt %189 : vector<16x1xf32>
    %191 = vector.broadcast %190 : vector<16x1xf32> to vector<16x32xf32>
    %192 = arith.mulf %187, %191 : vector<16x32xf32>
    %193 = vector.broadcast %173 : vector<1x32xf32> to vector<16x32xf32>
    %194 = arith.mulf %192, %193 : vector<16x32xf32>
    %195 = vector.broadcast %174 : vector<1x32xf32> to vector<16x32xf32>
    %196 = arith.addf %194, %195 : vector<16x32xf32>
    %197 = vector.shape_cast %196 : vector<16x32xf32> to vector<2x8x32xf32>
    %c0_72 = arith.constant 0 : index
    %c0_73 = arith.constant 0 : index
    %c0_74 = arith.constant 0 : index
    %198 = vector.load %arg14[%c0_72, %c0_73, %c0_74] : memref<2x8x32xf32, #tpu.memory_space<vmem>>, vector<2x8x32xf32>
    tpu.vector_store %arg14[%c0_72, %c0_73, %c0_74], %197 {strides = array<i32>} : memref<2x8x32xf32, #tpu.memory_space<vmem>>, vector<2x8x32xf32>,
    return
  }
  func.func @transform_0(%arg0: i32) -> (i32, i32, i32) {
    %c0_i32 = arith.constant 0 : i32
    %c0_i32_0 = arith.constant 0 : i32
    %c0_i32_1 = arith.constant 0 : i32
    return %arg0, %c0_i32, %c0_i32_0 : i32, i32, i32
  }
  func.func @transform_1(%arg0: i32) -> (i32, i32) {
    %c0_i32 = arith.constant 0 : i32
    %c0_i32_0 = arith.constant 0 : i32
    %c0_i32_1 = arith.constant 0 : i32
    return %c0_i32, %c0_i32_0 : i32, i32
  }
  func.func @transform_2(%arg0: i32) -> (i32, i32) {
    %c0_i32 = arith.constant 0 : i32
    %c0_i32_0 = arith.constant 0 : i32
    %c0_i32_1 = arith.constant 0 : i32
    return %c0_i32, %c0_i32_0 : i32, i32
  }
  func.func @transform_3(%arg0: i32) -> (i32, i32) {
    %c0_i32 = arith.constant 0 : i32
    %c0_i32_0 = arith.constant 0 : i32
    %c0_i32_1 = arith.constant 0 : i32
    return %c0_i32, %c0_i32_0 : i32, i32
  }
  func.func @transform_4(%arg0: i32) -> (i32, i32) {
    %c0_i32 = arith.constant 0 : i32
    %c0_i32_0 = arith.constant 0 : i32
    %c0_i32_1 = arith.constant 0 : i32
    return %c0_i32, %c0_i32_0 : i32, i32
  }
  func.func @transform_5(%arg0: i32) -> (i32, i32) {
    %c0_i32 = arith.constant 0 : i32
    %c0_i32_0 = arith.constant 0 : i32
    %c0_i32_1 = arith.constant 0 : i32
    return %c0_i32, %c0_i32_0 : i32, i32
  }
  func.func @transform_6(%arg0: i32) -> (i32, i32) {
    %c0_i32 = arith.constant 0 : i32
    %c0_i32_0 = arith.constant 0 : i32
    %c0_i32_1 = arith.constant 0 : i32
    return %c0_i32, %c0_i32_0 : i32, i32
  }
  func.func @transform_7(%arg0: i32) -> (i32, i32) {
    %c0_i32 = arith.constant 0 : i32
    %c0_i32_0 = arith.constant 0 : i32
    %c0_i32_1 = arith.constant 0 : i32
    return %c0_i32, %c0_i32_0 : i32, i32
  }
  func.func @transform_8(%arg0: i32) -> (i32, i32) {
    %c0_i32 = arith.constant 0 : i32
    %c0_i32_0 = arith.constant 0 : i32
    %c0_i32_1 = arith.constant 0 : i32
    return %c0_i32, %c0_i32_0 : i32, i32
  }
  func.func @transform_9(%arg0: i32) -> (i32, i32) {
    %c0_i32 = arith.constant 0 : i32
    %c0_i32_0 = arith.constant 0 : i32
    %c0_i32_1 = arith.constant 0 : i32
    return %c0_i32, %c0_i32_0 : i32, i32
  }
  func.func @transform_10(%arg0: i32) -> (i32, i32) {
    %c0_i32 = arith.constant 0 : i32
    %c0_i32_0 = arith.constant 0 : i32
    %c0_i32_1 = arith.constant 0 : i32
    return %c0_i32, %c0_i32_0 : i32, i32
  }
  func.func @transform_11(%arg0: i32) -> (i32, i32) {
    %c0_i32 = arith.constant 0 : i32
    %c0_i32_0 = arith.constant 0 : i32
    %c0_i32_1 = arith.constant 0 : i32
    return %c0_i32, %c0_i32_0 : i32, i32
  }
  func.func @transform_12(%arg0: i32) -> (i32, i32) {
    %c0_i32 = arith.constant 0 : i32
    %c0_i32_0 = arith.constant 0 : i32
    %c0_i32_1 = arith.constant 0 : i32
    return %c0_i32, %c0_i32_0 : i32, i32
  }
  func.func @transform_13(%arg0: i32) -> (i32, i32, i32) {
    %c0_i32 = arith.constant 0 : i32
    %c0_i32_0 = arith.constant 0 : i32
    %c0_i32_1 = arith.constant 0 : i32
    return %arg0, %c0_i32, %c0_i32_0 : i32, i32, i32
  }
  func.func @transform_14(%arg0: i32) -> (i32, i32, i32) {
    %c0_i32 = arith.constant 0 : i32
    %c0_i32_0 = arith.constant 0 : i32
    %c0_i32_1 = arith.constant 0 : i32
    return %arg0, %c0_i32, %c0_i32_0 : i32, i32, i32
  }
}

</mosaic_0001>

<llo_original>
// kernel: tpu_custom_call.1
$region0: #{tpu_custom_call.1}
  #allocation0 [shape = 'u32[]', space=smem, size = 0x4, offset = 0x4, fixed_abs, tag = 'smem constant byte address 0x4 - core index']
  #allocation1 [shape = 'u32[144,128]{1,0:T(1,128)}', space=vmem, size = 0x12000, scoped, tag = 'internal scratch']
  #allocation2 [shape = 'bf16[16,32]{1,0:T(16,128)(2,1)}', space=vmem, size = 0x1000, scoped, tag = 'scratch operand']
  %s0 = inlined_call_operand.vmem [shape: f32[4,8,32], index: 0, kind: input, shape index: {}]
  %s1 = inlined_call_operand.vmem [shape: bf16[32,96], index: 1, kind: input, shape index: {}]
  %s2 = inlined_call_operand.vmem [shape: f32[1,96], index: 2, kind: input, shape index: {}]
  %s3 = inlined_call_operand.hbm [shape: bf16[32,32], index: 3, kind: input, shape index: {}]
  %s4 = inlined_call_operand.vmem [shape: f32[1,32], index: 4, kind: input, shape index: {}]
  %s5 = inlined_call_operand.vmem [shape: f32[1,32], index: 5, kind: input, shape index: {}]
  %s6 = inlined_call_operand.vmem [shape: f32[1,32], index: 6, kind: input, shape index: {}]
  %s7 = inlined_call_operand.hbm [shape: bf16[32,64], index: 7, kind: input, shape index: {}]
  %s8 = inlined_call_operand.vmem [shape: f32[1,64], index: 8, kind: input, shape index: {}]
  %s9 = inlined_call_operand.vmem [shape: bf16[64,32], index: 9, kind: input, shape index: {}]
  %s10 = inlined_call_operand.vmem [shape: f32[1,32], index: 10, kind: input, shape index: {}]
  %s11 = inlined_call_operand.vmem [shape: f32[1,32], index: 11, kind: input, shape index: {}]
  %s12 = inlined_call_operand.vmem [shape: f32[1,32], index: 12, kind: input, shape index: {}]
  %s13 = inlined_call_operand.hbm [shape: f32[4,8,32], index: 13, kind: output, shape index: {0}]
  %s14 = inlined_call_operand.hbm [shape: f32[4,8,8], index: 14, kind: output, shape index: {1}]
  %15 = xla_tuple %s13, %s14
  %s16 = sld [smem:[#allocation0]]
  $region101: #{tpu_custom_call.1} parent=0
    _
  %s18 = ssub.s32 1, %s16
  %s19 = scalar_select 0, %s18, %s16
  $region1: #{tpu_custom_call.1} parent=0
    #allocation3 [shape = 'u8[8192]{0}', space=vmem, size = 0x2000, scoped, tag = 'input window, operand 3, single buffered']
    #allocation4 [shape = 's32[2]{0}', space=sflag, size = 0x8, scoped, tag = 'scoped memory for tpu_custom_call.1']
    #allocation5 [shape = 's32[2]{0}', space=sflag, size = 0x8, scoped, tag = 'scoped memory for tpu_custom_call.1']
    #allocation6 [shape = 'u8[8192]{0}', space=vmem, size = 0x2000, scoped, tag = 'input window, operand 7, single buffered']
    #allocation7 [shape = 's32[1]{0}', space=sflag, size = 0x4, scoped, tag = 'scoped memory for tpu_custom_call.1']
    #allocation8 [shape = 'u8[16384]{0}', space=vmem, size = 0x4000, scoped, tag = 'output window, operand 0']
    #allocation9 [shape = 'u8[16384]{0}', space=vmem, size = 0x4000, scoped, tag = 'output window, operand 1']
    #allocation10 [shape = 's32[2]{0}', space=sflag, size = 0x8, scoped, tag = 'scoped memory for tpu_custom_call.1']
    %20 = vsyncpa [#allocation4], 0
    %21 = vsyncpa [#allocation7], 0
    %22 = vsyncpa [#allocation5], 0
    %s23 = scalar_lea.sflag [#allocation5], 1
    %24 = vsyncpa %s23, 0
    %25 = vsyncpa [#allocation10], 0
    %s26 = scalar_lea.sflag [#allocation10], 1
    %27 = vsyncpa %s26, 0
    loop: start=0, step=1, limit=4
    $region2: #{tpu_custom_call.1} parent=1 // loop_pre_header
      _
    $region3: #{tpu_custom_call.1} parent=1 // loop_header
      %s29 = sphi 0, %s33
      %p30 = scmp.ge.s32.totalorder %s29, 4
      %s39 = sphi 0, %s41
      %s42 = sphi 0, %s39
      %s43 = sphi 0, %s42
      %s59 = sphi 0, %s43
      %s63 = sphi 0, %s63
      %s65 = sphi 0, %s63
      %s66 = sphi 0, %s65
      %s80 = sphi 0, %s66
      %s84 = sphi 0, %s84
      %s86 = sphi 0, %s84
      %s87 = sphi 0, %s86
      %s101 = sphi 0, %s87
      %s105 = sphi 0, %s105
      %s107 = sphi 0, %s105
      %s108 = sphi 0, %s107
      %s122 = sphi 0, %s108
      %s126 = sphi 0, %s126
      %s128 = sphi 0, %s126
      %s129 = sphi 0, %s128
      %s143 = sphi 0, %s129
      %s147 = sphi 0, %s147
      %s149 = sphi 0, %s147
      %s150 = sphi 0, %s149
      %s164 = sphi 0, %s150
      %s168 = sphi 0, %s168
      %s170 = sphi 0, %s168
      %s171 = sphi 0, %s170
      %s185 = sphi 0, %s171
      %s189 = sphi 0, %s189
      %s191 = sphi 0, %s189
      %s192 = sphi 0, %s191
      %s206 = sphi 0, %s192
      %s210 = sphi 0, %s210
      %s212 = sphi 0, %s210
      %s213 = sphi 0, %s212
      %s227 = sphi 0, %s213
      %s231 = sphi 0, %s231
      %s233 = sphi 0, %s231
      %s234 = sphi 0, %s233
      %s248 = sphi 0, %s234
      %s252 = sphi 0, %s252
      %s254 = sphi 0, %s252
      %s255 = sphi 0, %s254
      %s269 = sphi 0, %s255
      %s273 = sphi 0, %s273
      %s275 = sphi 0, %s273
      %s276 = sphi 0, %s275
      %s290 = sphi 0, %s276
      %s294 = sphi 0, %s294
      %s296 = sphi 0, %s294
      %s297 = sphi 0, %s296
      %s311 = sphi 0, %s297
      %s317 = sphi 0, %s319
      %s320 = sphi 0, %s317
      %s321 = sphi 0, %s320
      %s337 = sphi 0, %s321
      %s343 = sphi 0, %s345
      %s346 = sphi 0, %s343
      %s347 = sphi 0, %s346
      %s363 = sphi 0, %s347
    $region4: #{tpu_custom_call.1} parent=1 // loop_header_branch
      %32 = sbr.rel (%p30) target = $region8
    $region5: #{tpu_custom_call.1} parent=1 // loop_body
      %s34 = ssub.s32 %s29, 1
      %s35 = ssub.s32 %s29, 2
      %s36 = sadd.s32 %s29, 1
      %s37 = ssub.s32 %s29, %s36
      %p38 = scmp.eq.s32.totalorder %s37, 0
      %s40 = sadd.s32 %s39, 1
      %s41 = scalar_select %p38, %s39, %s40
      %p44 = pneg %p38
      %p45 = scmp.eq.s32.totalorder %s29, 1
      %p46 = por %p44, %p45
      %p47 = scmp.ne.s32.totalorder %s39, %s42
      %p48 = scmp.eq.s32.totalorder %s29, 0
      %p49 = por %p47, %p48
      %p50 = scmp.ne.s32.totalorder %s39, %s42
      %p51 = scmp.eq.s32.totalorder %s34, 1
      %p52 = por %p50, %p51
      %p53 = scmp.ne.s32.totalorder %s42, %s43
      %p54 = scmp.eq.s32.totalorder %s34, 0
      %p55 = por %p53, %p54
      %p56 = scmp.ne.s32.totalorder %s42, %s43
      %p57 = scmp.eq.s32.totalorder %s35, 1
      %p58 = por %p56, %p57
      %p60 = scmp.ne.s32.totalorder %s43, %s59
      %p61 = scmp.eq.s32.totalorder %s35, 0
      %p62 = por %p60, %p61
      %s64 = sadd.s32 %s63, 1
      %p67 = scmp.eq.s32.totalorder %s29, 1
      %p68 = scmp.ne.s32.totalorder %s63, %s65
      %p69 = scmp.eq.s32.totalorder %s29, 0
      %p70 = por %p68, %p69
      %p71 = scmp.ne.s32.totalorder %s63, %s65
      %p72 = scmp.eq.s32.totalorder %s34, 1
      %p73 = por %p71, %p72
      %p74 = scmp.ne.s32.totalorder %s65, %s66
      %p75 = scmp.eq.s32.totalorder %s34, 0
      %p76 = por %p74, %p75
      %p77 = scmp.ne.s32.totalorder %s65, %s66
      %p78 = scmp.eq.s32.totalorder %s35, 1
      %p79 = por %p77, %p78
      %p81 = scmp.ne.s32.totalorder %s66, %s80
      %p82 = scmp.eq.s32.totalorder %s35, 0
      %p83 = por %p81, %p82
      %s85 = sadd.s32 %s84, 1
      %p88 = scmp.eq.s32.totalorder %s29, 1
      %p89 = scmp.ne.s32.totalorder %s84, %s86
      %p90 = scmp.eq.s32.totalorder %s29, 0
      %p91 = por %p89, %p90
      %p92 = scmp.ne.s32.totalorder %s84, %s86
      %p93 = scmp.eq.s32.totalorder %s34, 1
      %p94 = por %p92, %p93
      %p95 = scmp.ne.s32.totalorder %s86, %s87
      %p96 = scmp.eq.s32.totalorder %s34, 0
      %p97 = por %p95, %p96
      %p98 = scmp.ne.s32.totalorder %s86, %s87
      %p99 = scmp.eq.s32.totalorder %s35, 1
      %p100 = por %p98, %p99
      %p102 = scmp.ne.s32.totalorder %s87, %s101
      %p103 = scmp.eq.s32.totalorder %s35, 0
      %p104 = por %p102, %p103
      %s106 = sadd.s32 %s105, 1
      %p109 = scmp.eq.s32.totalorder %s29, 1
      %p110 = scmp.ne.s32.totalorder %s105, %s107
      %p111 = scmp.eq.s32.totalorder %s29, 0
      %p112 = por %p110, %p111
      %p113 = scmp.ne.s32.totalorder %s105, %s107
      %p114 = scmp.eq.s32.totalorder %s34, 1
      %p115 = por %p113, %p114
      %p116 = scmp.ne.s32.totalorder %s107, %s108
      %p117 = scmp.eq.s32.totalorder %s34, 0
      %p118 = por %p116, %p117
      %p119 = scmp.ne.s32.totalorder %s107, %s108
      %p120 = scmp.eq.s32.totalorder %s35, 1
      %p121 = por %p119, %p120
      %p123 = scmp.ne.s32.totalorder %s108, %s122
      %p124 = scmp.eq.s32.totalorder %s35, 0
      %p125 = por %p123, %p124
      %s127 = sadd.s32 %s126, 1
      %p130 = scmp.eq.s32.totalorder %s29, 1
      %p131 = scmp.ne.s32.totalorder %s126, %s128
      %p132 = scmp.eq.s32.totalorder %s29, 0
      %p133 = por %p131, %p132
      %p134 = scmp.ne.s32.totalorder %s126, %s128
      %p135 = scmp.eq.s32.totalorder %s34, 1
      %p136 = por %p134, %p135
      %p137 = scmp.ne.s32.totalorder %s128, %s129
      %p138 = scmp.eq.s32.totalorder %s34, 0
      %p139 = por %p137, %p138
      %p140 = scmp.ne.s32.totalorder %s128, %s129
      %p141 = scmp.eq.s32.totalorder %s35, 1
      %p142 = por %p140, %p141
      %p144 = scmp.ne.s32.totalorder %s129, %s143
      %p145 = scmp.eq.s32.totalorder %s35, 0
      %p146 = por %p144, %p145
      %s148 = sadd.s32 %s147, 1
      %p151 = scmp.eq.s32.totalorder %s29, 1
      %p152 = scmp.ne.s32.totalorder %s147, %s149
      %p153 = scmp.eq.s32.totalorder %s29, 0
      %p154 = por %p152, %p153
      %p155 = scmp.ne.s32.totalorder %s147, %s149
      %p156 = scmp.eq.s32.totalorder %s34, 1
      %p157 = por %p155, %p156
      %p158 = scmp.ne.s32.totalorder %s149, %s150
      %p159 = scmp.eq.s32.totalorder %s34, 0
      %p160 = por %p158, %p159
      %p161 = scmp.ne.s32.totalorder %s149, %s150
      %p162 = scmp.eq.s32.totalorder %s35, 1
      %p163 = por %p161, %p162
      %p165 = scmp.ne.s32.totalorder %s150, %s164
      %p166 = scmp.eq.s32.totalorder %s35, 0
      %p167 = por %p165, %p166
      %s169 = sadd.s32 %s168, 1
      %p172 = scmp.eq.s32.totalorder %s29, 1
      %p173 = scmp.ne.s32.totalorder %s168, %s170
      %p174 = scmp.eq.s32.totalorder %s29, 0
      %p175 = por %p173, %p174
      %p176 = scmp.ne.s32.totalorder %s168, %s170
      %p177 = scmp.eq.s32.totalorder %s34, 1
      %p178 = por %p176, %p177
      %p179 = scmp.ne.s32.totalorder %s170, %s171
      %p180 = scmp.eq.s32.totalorder %s34, 0
      %p181 = por %p179, %p180
      %p182 = scmp.ne.s32.totalorder %s170, %s171
      %p183 = scmp.eq.s32.totalorder %s35, 1
      %p184 = por %p182, %p183
      %p186 = scmp.ne.s32.totalorder %s171, %s185
      %p187 = scmp.eq.s32.totalorder %s35, 0
      %p188 = por %p186, %p187
      %s190 = sadd.s32 %s189, 1
      %p193 = scmp.eq.s32.totalorder %s29, 1
      %p194 = scmp.ne.s32.totalorder %s189, %s191
      %p195 = scmp.eq.s32.totalorder %s29, 0
      %p196 = por %p194, %p195
      %p197 = scmp.ne.s32.totalorder %s189, %s191
      %p198 = scmp.eq.s32.totalorder %s34, 1
      %p199 = por %p197, %p198
      %p200 = scmp.ne.s32.totalorder %s191, %s192
      %p201 = scmp.eq.s32.totalorder %s34, 0
      %p202 = por %p200, %p201
      %p203 = scmp.ne.s32.totalorder %s191, %s192
      %p204 = scmp.eq.s32.totalorder %s35, 1
      %p205 = por %p203, %p204
      %p207 = scmp.ne.s32.totalorder %s192, %s206
      %p208 = scmp.eq.s32.totalorder %s35, 0
      %p209 = por %p207, %p208
      %s211 = sadd.s32 %s210, 1
      %p214 = scmp.eq.s32.totalorder %s29, 1
      %p215 = scmp.ne.s32.totalorder %s210, %s212
      %p216 = scmp.eq.s32.totalorder %s29, 0
      %p217 = por %p215, %p216
      %p218 = scmp.ne.s32.totalorder %s210, %s212
      %p219 = scmp.eq.s32.totalorder %s34, 1
      %p220 = por %p218, %p219
      %p221 = scmp.ne.s32.totalorder %s212, %s213
      %p222 = scmp.eq.s32.totalorder %s34, 0
      %p223 = por %p221, %p222
      %p224 = scmp.ne.s32.totalorder %s212, %s213
      %p225 = scmp.eq.s32.totalorder %s35, 1
      %p226 = por %p224, %p225
      %p228 = scmp.ne.s32.totalorder %s213, %s227
      %p229 = scmp.eq.s32.totalorder %s35, 0
      %p230 = por %p228, %p229
      %s232 = sadd.s32 %s231, 1
      %p235 = scmp.eq.s32.totalorder %s29, 1
      %p236 = scmp.ne.s32.totalorder %s231, %s233
      %p237 = scmp.eq.s32.totalorder %s29, 0
      %p238 = por %p236, %p237
      %p239 = scmp.ne.s32.totalorder %s231, %s233
      %p240 = scmp.eq.s32.totalorder %s34, 1
      %p241 = por %p239, %p240
      %p242 = scmp.ne.s32.totalorder %s233, %s234
      %p243 = scmp.eq.s32.totalorder %s34, 0
      %p244 = por %p242, %p243
      %p245 = scmp.ne.s32.totalorder %s233, %s234
      %p246 = scmp.eq.s32.totalorder %s35, 1
      %p247 = por %p245, %p246
      %p249 = scmp.ne.s32.totalorder %s234, %s248
      %p250 = scmp.eq.s32.totalorder %s35, 0
      %p251 = por %p249, %p250
      %s253 = sadd.s32 %s252, 1
      %p256 = scmp.eq.s32.totalorder %s29, 1
      %p257 = scmp.ne.s32.totalorder %s252, %s254
      %p258 = scmp.eq.s32.totalorder %s29, 0
      %p259 = por %p257, %p258
      %p260 = scmp.ne.s32.totalorder %s252, %s254
      %p261 = scmp.eq.s32.totalorder %s34, 1
      %p262 = por %p260, %p261
      %p263 = scmp.ne.s32.totalorder %s254, %s255
      %p264 = scmp.eq.s32.totalorder %s34, 0
      %p265 = por %p263, %p264
      %p266 = scmp.ne.s32.totalorder %s254, %s255
      %p267 = scmp.eq.s32.totalorder %s35, 1
      %p268 = por %p266, %p267
      %p270 = scmp.ne.s32.totalorder %s255, %s269
      %p271 = scmp.eq.s32.totalorder %s35, 0
      %p272 = por %p270, %p271
      %s274 = sadd.s32 %s273, 1
      %p277 = scmp.eq.s32.totalorder %s29, 1
      %p278 = scmp.ne.s32.totalorder %s273, %s275
      %p279 = scmp.eq.s32.totalorder %s29, 0
      %p280 = por %p278, %p279
      %p281 = scmp.ne.s32.totalorder %s273, %s275
      %p282 = scmp.eq.s32.totalorder %s34, 1
      %p283 = por %p281, %p282
      %p284 = scmp.ne.s32.totalorder %s275, %s276
      %p285 = scmp.eq.s32.totalorder %s34, 0
      %p286 = por %p284, %p285
      %p287 = scmp.ne.s32.totalorder %s275, %s276
      %p288 = scmp.eq.s32.totalorder %s35, 1
      %p289 = por %p287, %p288
      %p291 = scmp.ne.s32.totalorder %s276, %s290
      %p292 = scmp.eq.s32.totalorder %s35, 0
      %p293 = por %p291, %p292
      %s295 = sadd.s32 %s294, 1
      %p298 = scmp.eq.s32.totalorder %s29, 1
      %p299 = scmp.ne.s32.totalorder %s294, %s296
      %p300 = scmp.eq.s32.totalorder %s29, 0
      %p301 = por %p299, %p300
      %p302 = scmp.ne.s32.totalorder %s294, %s296
      %p303 = scmp.eq.s32.totalorder %s34, 1
      %p304 = por %p302, %p303
      %p305 = scmp.ne.s32.totalorder %s296, %s297
      %p306 = scmp.eq.s32.totalorder %s34, 0
      %p307 = por %p305, %p306
      %p308 = scmp.ne.s32.totalorder %s296, %s297
      %p309 = scmp.eq.s32.totalorder %s35, 1
      %p310 = por %p308, %p309
      %p312 = scmp.ne.s32.totalorder %s297, %s311
      %p313 = scmp.eq.s32.totalorder %s35, 0
      %p314 = por %p312, %p313
      %s315 = ssub.s32 %s29, %s36
      %p316 = scmp.eq.s32.totalorder %s315, 0
      %s318 = sadd.s32 %s317, 1
      %s319 = scalar_select %p316, %s317, %s318
      %p322 = pneg %p316
      %p323 = scmp.eq.s32.totalorder %s29, 1
      %p324 = por %p322, %p323
      %p325 = scmp.ne.s32.totalorder %s317, %s320
      %p326 = scmp.eq.s32.totalorder %s29, 0
      %p327 = por %p325, %p326
      %p328 = scmp.ne.s32.totalorder %s317, %s320
      %p329 = scmp.eq.s32.totalorder %s34, 1
      %p330 = por %p328, %p329
      %p331 = scmp.ne.s32.totalorder %s320, %s321
      %p332 = scmp.eq.s32.totalorder %s34, 0
      %p333 = por %p331, %p332
      %p334 = scmp.ne.s32.totalorder %s320, %s321
      %p335 = scmp.eq.s32.totalorder %s35, 1
      %p336 = por %p334, %p335
      %p338 = scmp.ne.s32.totalorder %s321, %s337
      %p339 = scmp.eq.s32.totalorder %s35, 0
      %p340 = por %p338, %p339
      %s341 = ssub.s32 %s29, %s36
      %p342 = scmp.eq.s32.totalorder %s341, 0
      %s344 = sadd.s32 %s343, 1
      %s345 = scalar_select %p342, %s343, %s344
      %p348 = pneg %p342
      %p349 = scmp.eq.s32.totalorder %s29, 1
      %p350 = por %p348, %p349
      %p351 = scmp.ne.s32.totalorder %s343, %s346
      %p352 = scmp.eq.s32.totalorder %s29, 0
      %p353 = por %p351, %p352
      %p354 = scmp.ne.s32.totalorder %s343, %s346
      %p355 = scmp.eq.s32.totalorder %s34, 1
      %p356 = por %p354, %p355
      %p357 = scmp.ne.s32.totalorder %s346, %s347
      %p358 = scmp.eq.s32.totalorder %s34, 0
      %p359 = por %p357, %p358
      %p360 = scmp.ne.s32.totalorder %s346, %s347
      %p361 = scmp.eq.s32.totalorder %s35, 1
      %p362 = por %p360, %p361
      %p364 = scmp.ne.s32.totalorder %s347, %s363
      %p365 = scmp.eq.s32.totalorder %s35, 0
      %p366 = por %p364, %p365
      %p367 = scmp.le.s32.totalorder 1, %s29
      %p368 = scmp.lt.s32.totalorder %s29, 3
      %p369 = pnand %p367, %p368
      %p370 = pneg %p369
      // Predicated region
      $region9: #{tpu_custom_call.1} parent=5 // pred_check
        _
      $region10: #{tpu_custom_call.1} parent=5 // pred_check_branch
        %372 = sbr.rel (%p369) target = $region12
      $region11: #{tpu_custom_call.1} parent=5 // pred_region
        %s373 = ssub.s32 %s29, 1
        // Predicated region
        $region13: #{tpu_custom_call.1} parent=11 // pred_check
          %p374 = pneg %p76
        $region14: #{tpu_custom_call.1} parent=11 // pred_check_branch
          %376 = sbr.rel (%p374) target = $region16
        $region15: #{tpu_custom_call.1} parent=11 // pred_region
          _
        $region16: #{tpu_custom_call.1} parent=11 // pred_fallthru
          _
        // Predicated region
        $region17: #{tpu_custom_call.1} parent=11 // pred_check
          %p377 = pneg %p97
        $region18: #{tpu_custom_call.1} parent=11 // pred_check_branch
          %379 = sbr.rel (%p377) target = $region20
        $region19: #{tpu_custom_call.1} parent=11 // pred_region
          _
        $region20: #{tpu_custom_call.1} parent=11 // pred_fallthru
          _
        // Predicated region
        $region21: #{tpu_custom_call.1} parent=11 // pred_check
          %p380 = pneg %p118
        $region22: #{tpu_custom_call.1} parent=11 // pred_check_branch
          %382 = sbr.rel (%p380) target = $region24
        $region23: #{tpu_custom_call.1} parent=11 // pred_region
          %s384 = ssub.s32 256, 256
          %385 = vsyncadd [#allocation4], %s384
          %s386 = sshll.u32 [#allocation3], 4
          %s387 = int_to_ptr.vmem [resolvable:$true] %s386
          %392 = dma.hbm_to_vmem [thread:$0]  %s3, 256, %s387, [#allocation4], 64, 64, 4
        $region24: #{tpu_custom_call.1} parent=11 // pred_fallthru
          _
        // Predicated region
        $region25: #{tpu_custom_call.1} parent=11 // pred_check
          %p393 = pneg %p139
        $region26: #{tpu_custom_call.1} parent=11 // pred_check_branch
          %395 = sbr.rel (%p393) target = $region28
        $region27: #{tpu_custom_call.1} parent=11 // pred_region
          _
        $region28: #{tpu_custom_call.1} parent=11 // pred_fallthru
          _
        // Predicated region
        $region29: #{tpu_custom_call.1} parent=11 // pred_check
          %p396 = pneg %p160
        $region30: #{tpu_custom_call.1} parent=11 // pred_check_branch
          %398 = sbr.rel (%p396) target = $region32
        $region31: #{tpu_custom_call.1} parent=11 // pred_region
          _
        $region32: #{tpu_custom_call.1} parent=11 // pred_fallthru
          _
        // Predicated region
        $region33: #{tpu_custom_call.1} parent=11 // pred_check
          %p399 = pneg %p181
        $region34: #{tpu_custom_call.1} parent=11 // pred_check_branch
          %401 = sbr.rel (%p399) target = $region36
        $region35: #{tpu_custom_call.1} parent=11 // pred_region
          _
        $region36: #{tpu_custom_call.1} parent=11 // pred_fallthru
          _
        // Predicated region
        $region37: #{tpu_custom_call.1} parent=11 // pred_check
          %p402 = pneg %p202
        $region38: #{tpu_custom_call.1} parent=11 // pred_check_branch
          %404 = sbr.rel (%p402) target = $region40
        $region39: #{tpu_custom_call.1} parent=11 // pred_region
          %s406 = ssub.s32 256, 256
          %407 = vsyncadd [#allocation7], %s406
          %s408 = sshll.u32 [#allocation6], 4
          %s409 = int_to_ptr.vmem [resolvable:$true] %s408
          %414 = dma.hbm_to_vmem [thread:$0]  %s7, 256, %s409, [#allocation7], 64, 64, 4
        $region40: #{tpu_custom_call.1} parent=11 // pred_fallthru
          _
        // Predicated region
        $region41: #{tpu_custom_call.1} parent=11 // pred_check
          %p415 = pneg %p223
        $region42: #{tpu_custom_call.1} parent=11 // pred_check_branch
          %417 = sbr.rel (%p415) target = $region44
        $region43: #{tpu_custom_call.1} parent=11 // pred_region
          _
        $region44: #{tpu_custom_call.1} parent=11 // pred_fallthru
          _
        // Predicated region
        $region45: #{tpu_custom_call.1} parent=11 // pred_check
          %p418 = pneg %p244
        $region46: #{tpu_custom_call.1} parent=11 // pred_check_branch
          %420 = sbr.rel (%p418) target = $region48
        $region47: #{tpu_custom_call.1} parent=11 // pred_region
          _
        $region48: #{tpu_custom_call.1} parent=11 // pred_fallthru
          _
        // Predicated region
        $region49: #{tpu_custom_call.1} parent=11 // pred_check
          %p421 = pneg %p265
        $region50: #{tpu_custom_call.1} parent=11 // pred_check_branch
          %423 = sbr.rel (%p421) target = $region52
        $region51: #{tpu_custom_call.1} parent=11 // pred_region
          _
        $region52: #{tpu_custom_call.1} parent=11 // pred_fallthru
          _
        // Predicated region
        $region53: #{tpu_custom_call.1} parent=11 // pred_check
          %p424 = pneg %p286
        $region54: #{tpu_custom_call.1} parent=11 // pred_check_branch
          %426 = sbr.rel (%p424) target = $region56
        $region55: #{tpu_custom_call.1} parent=11 // pred_region
          _
        $region56: #{tpu_custom_call.1} parent=11 // pred_fallthru
          _
        // Predicated region
        $region57: #{tpu_custom_call.1} parent=11 // pred_check
          %p427 = pneg %p307
        $region58: #{tpu_custom_call.1} parent=11 // pred_check_branch
          %429 = sbr.rel (%p427) target = $region60
        $region59: #{tpu_custom_call.1} parent=11 // pred_region
          _
        $region60: #{tpu_custom_call.1} parent=11 // pred_fallthru
          _
      $region12: #{tpu_custom_call.1} parent=5 // pred_fallthru
        _
      %p430 = scmp.lt.s32.totalorder %s29, 2
      // Predicated region
      $region61: #{tpu_custom_call.1} parent=5 // pred_check
        %p431 = pneg %p430
      $region62: #{tpu_custom_call.1} parent=5 // pred_check_branch
        %433 = sbr.rel (%p431) target = $region64
      $region63: #{tpu_custom_call.1} parent=5 // pred_region
        // Predicated region
        $region65: #{tpu_custom_call.1} parent=63 // pred_check
          %p434 = pneg %p49
        $region66: #{tpu_custom_call.1} parent=63 // pred_check_branch
          %436 = sbr.rel (%p434) target = $region68
        $region67: #{tpu_custom_call.1} parent=63 // pred_region
          %s437 = smul.u32 2, %s29
          %p438 = scmp.lt.s32.totalorder %s437, 3
          %s439 = scalar_select %p438, %s437, 3
          %s440 = smul.addr %s439, 8
          %s441 = scalar_lea.vmem %s0, %s440
          %s442 = smul.u32 2, %s29
        $region68: #{tpu_custom_call.1} parent=63 // pred_fallthru
          _
      $region64: #{tpu_custom_call.1} parent=5 // pred_fallthru
        _
      %p443 = scmp.le.s32.totalorder 1, %s29
      %p444 = scmp.lt.s32.totalorder %s29, 3
      %p445 = pnand %p443, %p444
      %p446 = pneg %p445
      // Predicated region
      $region69: #{tpu_custom_call.1} parent=5 // pred_check
        _
      $region70: #{tpu_custom_call.1} parent=5 // pred_check_branch
        %448 = sbr.rel (%p445) target = $region72
      $region71: #{tpu_custom_call.1} parent=5 // pred_region
        %s449 = ssub.s32 %s29, 1
        // Predicated region
        $region73: #{tpu_custom_call.1} parent=71 // pred_check
          %p450 = pneg %p118
        $region74: #{tpu_custom_call.1} parent=71 // pred_check_branch
          %452 = sbr.rel (%p450) target = $region76
        $region75: #{tpu_custom_call.1} parent=71 // pred_region
          %453 = dma.done [#allocation4], 256
        $region76: #{tpu_custom_call.1} parent=71 // pred_fallthru
          _
        // Predicated region
        $region77: #{tpu_custom_call.1} parent=71 // pred_check
          %p454 = pneg %p202
        $region78: #{tpu_custom_call.1} parent=71 // pred_check_branch
          %456 = sbr.rel (%p454) target = $region80
        $region79: #{tpu_custom_call.1} parent=71 // pred_region
          %457 = dma.done [#allocation7], 256
        $region80: #{tpu_custom_call.1} parent=71 // pred_fallthru
          _
        %s458 = smul.u32 2, %s34
        %p459 = scmp.lt.s32.totalorder %s458, 3
        %s460 = scalar_select %p459, %s458, 3
        %s461 = smul.addr %s460, 8
        %s462 = scalar_lea.vmem %s0, %s461
        %p463 = pneg %p55
        %p464 = pneg %p52
        %p465 = pneg %p76
        %p466 = pneg %p73
        %p467 = pneg %p97
        %p468 = pneg %p94
        %p469 = pneg %p118
        %p470 = pneg %p115
        %p471 = pneg %p139
        %p472 = pneg %p136
        %p473 = pneg %p160
        %p474 = pneg %p157
        %p475 = pneg %p181
        %p476 = pneg %p178
        %p477 = pneg %p202
        %p478 = pneg %p199
        %p479 = pneg %p223
        %p480 = pneg %p220
        %p481 = pneg %p244
        %p482 = pneg %p241
        %p483 = pneg %p265
        %p484 = pneg %p262
        %p485 = pneg %p286
        %p486 = pneg %p283
        %p487 = pneg %p307
        %p488 = pneg %p304
        %p489 = pneg %p333
        %p490 = pneg %p330
        %s491 = sand.u32 %s320, 1
        %s492 = scalar_lea.sflag [#allocation5], %s491
        %s493 = sand.u32 %s320, 1
        %s494 = smul.addr %s493, 16
        %s495 = scalar_lea.vmem [#allocation8], %s494
        %p496 = pneg %p359
        %p497 = pneg %p356
        %s498 = sand.u32 %s346, 1
        %s499 = scalar_lea.sflag [#allocation10], %s498
        %s500 = sand.u32 %s346, 1
        %s501 = smul.addr %s500, 16
        %s502 = scalar_lea.vmem [#allocation9], %s501
        %s503 = smul.u32 2, %s34
        %p504 = scmp.lt.s32.totalorder %s503, 3
        %s505 = scalar_select %p504, %s503, 3
        %s506 = smul.addr %s505, 8
        %s507 = scalar_lea.vmem %s0, %s506
        %s508 = smul.u32 2, %s34
        %s509 = smul.u32 2, %s34
        %s510 = smul.u32 2, %s34
        %v512 = vld [vmem:[%s507] sm:$0xff]
        %v513 = vld [vmem:[%s507 + $0x8] sm:$0xff]
        %v514 = vld [vmem:[%s1] sm:$0xf]
        %v515 = vld [vmem:[%s1 + $0x4] sm:$0xf]
        %v516 = vld [vmem:[%s1 + $0x8] sm:$0xf]
        %v517 = vld [vmem:[%s1 + $0xc] sm:$0xf]
        %v518 = vld [vmem:[%s2] sm:$0x1]
        %v519 = vpack.c.bf16 %v513, %v512
        %v521 = vlaneseq
        %v522 = vshrl.u32 %v521, 7
        %v523 = vsub.s32 0, %v522
        %v524 = vrot.slane %v518, %v523
        %v530 = vunpack.c.l.b16 %v514
        %v531 = vunpack.c.l.b16 %v515
        %v532 = vunpack.c.l.b16 %v516
        %v533 = vunpack.c.l.b16 %v517
        %v534 = vpack.c.b16 %v531, %v530
        %v535 = vpack.c.b16 %v533, %v532
        %vm538 = vcmask 261120
        %v540 = vsel %vm538, %v519, 0
        %542 = vmatprep.subr.bf16.mxu0 0
        %543 = vmatpush1.bf16.msra.mxu0 %v534
        %544 = vmatprep.subr.bf16.mxu0 0
        %545 = vmatpush1.bf16.msra.mxu0 %v535
        %546 = vmatprep.subr.bf16.mxu0 0
        %547 = vmatpush1.bf16.msra.mxu0 0
        %548 = vmatprep.subr.bf16.mxu0 0
        %549 = vmatpush1.bf16.msra.mxu0 0
        %550 = vmatprep.subr.bf16.mxu0 0
        %551 = vmatpush1.bf16.msra.mxu0 0
        %552 = vmatprep.subr.bf16.mxu0 0
        %553 = vmatpush1.bf16.msra.mxu0 0
        %554 = vmatprep.subr.bf16.mxu0 0
        %555 = vmatpush1.bf16.msra.mxu0 0
        %556 = vmatprep.subr.bf16.mxu0 0
        %557 = vmatpush1.bf16.msra.mxu0 0
        %558 = vmatprep.subr.bf16.mxu0 0
        %559 = vmatpush1.bf16.msra.mxu0 0
        %560 = vmatprep.subr.bf16.mxu0 0
        %561 = vmatpush1.bf16.msra.mxu0 0
        %562 = vmatprep.subr.bf16.mxu0 0
        %563 = vmatpush1.bf16.msra.mxu0 0
        %564 = vmatprep.subr.bf16.mxu0 0
        %565 = vmatpush1.bf16.msra.mxu0 0
        %566 = vmatprep.subr.bf16.mxu0 0
        %567 = vmatpush1.bf16.msra.mxu0 0
        %568 = vmatprep.subr.bf16.mxu0 0
        %569 = vmatpush1.bf16.msra.mxu0 0
        %570 = vmatprep.subr.bf16.mxu0 0
        %571 = vmatpush1.bf16.msra.mxu0 0
        %572 = vmatprep.subr.bf16.mxu0 0
        %573 = vmatpush1.bf16.msra.mxu0 0
        %574 = vmatprep.mubr.bf16.mxu0 0
        %575 = vmatmul.mubr.bf16.gmra.mrb[0].mxu0 %v540
        %v576 = vpop.f32.mrb[0].mxu0
        %v577 = vadd.f32 %v524, %v576
        %v578 = vpop.f32.mrb[0].mxu0
        %v579 = vpop.f32.mrb[0].mxu0
        %v580 = vadd.f32 %v524, %v579
        %v581 = vpop.f32.mrb[0].mxu0
        %582 = vdwg.mxu0
        %v583 = vpack.c.bf16 %v577, %v577
        %v584 = vpack.c.bf16 %v580, %v580
        %586 = vrot.lane.b32.xlu0 %v583, 96
        %v587 = vpop.permute.xlu0 %586
        %vm588 = vcmask 64512
        %v590 = vsel %vm588, %v583, 0
        %v593 = vsel %vm588, %v587, 0
        %595 = vmatprep.subr.bf16.mxu0 0
        %596 = vmatpush1.bf16.xpose.msra.mxu0 %v593
        %597 = vmatprep.subr.bf16.mxu0 0
        %598 = vmatpush1.bf16.xpose.msra.mxu0 0
        %599 = vmatprep.subr.bf16.mxu0 0
        %600 = vmatpush1.bf16.xpose.msra.mxu0 0
        %601 = vmatprep.subr.bf16.mxu0 0
        %602 = vmatpush1.bf16.xpose.msra.mxu0 0
        %603 = vmatprep.subr.bf16.mxu0 0
        %604 = vmatpush1.bf16.xpose.msra.mxu0 0
        %605 = vmatprep.subr.bf16.mxu0 0
        %606 = vmatpush1.bf16.xpose.msra.mxu0 0
        %607 = vmatprep.subr.bf16.mxu0 0
        %608 = vmatpush1.bf16.xpose.msra.mxu0 0
        %609 = vmatprep.subr.bf16.mxu0 0
        %610 = vmatpush1.bf16.xpose.msra.mxu0 0
        %611 = vmatprep.subr.bf16.mxu0 0
        %612 = vmatpush1.bf16.xpose.msra.mxu0 0
        %613 = vmatprep.subr.bf16.mxu0 0
        %614 = vmatpush1.bf16.xpose.msra.mxu0 0
        %615 = vmatprep.subr.bf16.mxu0 0
        %616 = vmatpush1.bf16.xpose.msra.mxu0 0
        %617 = vmatprep.subr.bf16.mxu0 0
        %618 = vmatpush1.bf16.xpose.msra.mxu0 0
        %619 = vmatprep.subr.bf16.mxu0 0
        %620 = vmatpush1.bf16.xpose.msra.mxu0 0
        %621 = vmatprep.subr.bf16.mxu0 0
        %622 = vmatpush1.bf16.xpose.msra.mxu0 0
        %623 = vmatprep.subr.bf16.mxu0 0
        %624 = vmatpush1.bf16.xpose.msra.mxu0 0
        %625 = vmatprep.subr.bf16.mxu0 0
        %626 = vmatpush1.bf16.xpose.msra.mxu0 0
        %627 = vmatprep.mubr.bf16.mxu0 0
        %628 = vmatmul.mubr.bf16.gmra.mrb[0].mxu0 %v590
        %v629 = vpop.f32.mrb[0].mxu0
        %v630 = vadd.f32 0.0, %v629
        %v631 = vpop.f32.mrb[0].mxu0
        %v632 = vpop.f32.mrb[0].mxu0
        %v633 = vpop.f32.mrb[0].mxu0
        %634 = vdwg.mxu0
        %636 = vrot.lane.b32.xlu0 %v584, 96
        %v637 = vpop.permute.xlu0 %636
        %v639 = vsel %vm588, %v584, 0
        %v642 = vsel %vm588, %v637, 0
        %644 = vmatprep.subr.bf16.mxu0 0
        %645 = vmatpush1.bf16.xpose.msra.mxu0 %v642
        %646 = vmatprep.subr.bf16.mxu0 0
        %647 = vmatpush1.bf16.xpose.msra.mxu0 0
        %648 = vmatprep.subr.bf16.mxu0 0
        %649 = vmatpush1.bf16.xpose.msra.mxu0 0
        %650 = vmatprep.subr.bf16.mxu0 0
        %651 = vmatpush1.bf16.xpose.msra.mxu0 0
        %652 = vmatprep.subr.bf16.mxu0 0
        %653 = vmatpush1.bf16.xpose.msra.mxu0 0
        %654 = vmatprep.subr.bf16.mxu0 0
        %655 = vmatpush1.bf16.xpose.msra.mxu0 0
        %656 = vmatprep.subr.bf16.mxu0 0
        %657 = vmatpush1.bf16.xpose.msra.mxu0 0
        %658 = vmatprep.subr.bf16.mxu0 0
        %659 = vmatpush1.bf16.xpose.msra.mxu0 0
        %660 = vmatprep.subr.bf16.mxu0 0
        %661 = vmatpush1.bf16.xpose.msra.mxu0 0
        %662 = vmatprep.subr.bf16.mxu0 0
        %663 = vmatpush1.bf16.xpose.msra.mxu0 0
        %664 = vmatprep.subr.bf16.mxu0 0
        %665 = vmatpush1.bf16.xpose.msra.mxu0 0
        %666 = vmatprep.subr.bf16.mxu0 0
        %667 = vmatpush1.bf16.xpose.msra.mxu0 0
        %668 = vmatprep.subr.bf16.mxu0 0
        %669 = vmatpush1.bf16.xpose.msra.mxu0 0
        %670 = vmatprep.subr.bf16.mxu0 0
        %671 = vmatpush1.bf16.xpose.msra.mxu0 0
        %672 = vmatprep.subr.bf16.mxu0 0
        %673 = vmatpush1.bf16.xpose.msra.mxu0 0
        %674 = vmatprep.subr.bf16.mxu0 0
        %675 = vmatpush1.bf16.xpose.msra.mxu0 0
        %676 = vmatprep.mubr.bf16.mxu0 0
        %677 = vmatmul.mubr.bf16.gmra.mrb[0].mxu0 %v639
        %v678 = vpop.f32.mrb[0].mxu0
        %v679 = vadd.f32 0.0, %v678
        %v680 = vpop.f32.mrb[0].mxu0
        %v681 = vpop.f32.mrb[0].mxu0
        %v682 = vpop.f32.mrb[0].mxu0
        %683 = vdwg.mxu0
        %v684 = vmul.f32 %v630, 0.35355338
        %v685 = vmul.f32 %v679, 0.35355338
        %v686 = vsel %vm588, %v684, -inf
        %687 = vmax.xlane.f32.xlu0 %v686
        %v688 = vpop.xlane.xlu0 %687
        %v689 = vsel %vm588, %v685, -inf
        %690 = vmax.xlane.f32.xlu0 %v689
        %v691 = vpop.xlane.xlu0 %690
        %v692 = vsub.f32 %v684, %v688
        %v693 = vsub.f32 %v685, %v691
        %v694 = vmul.f32 %v692, 1.442695
        %v695 = vpow.pop %v694
        %v696 = vmul.f32 %v693, 1.442695
        %v697 = vpow.pop %v696
        %v698 = vsel %vm588, %v695, 0.0
        %699 = vadd.xlane.f32.xlu0 %v698
        %v700 = vpop.xlane.xlu0 %699
        %v701 = vsel %vm588, %v697, 0.0
        %702 = vadd.xlane.f32.xlu0 %v701
        %v703 = vpop.xlane.xlu0 %702
        %v704 = vrcp.pop %v700
        %v705 = vrcp.pop %v703
        %v706 = vmul.f32 %v695, %v704
        %v707 = vmul.f32 %v697, %v705
        %v708 = vadd.f32 %v706, 0.0
        %v709 = vadd.f32 %v707, 0.0
        %v710 = vpack.c.bf16 %v706, %v706
        %v711 = vpack.c.bf16 %v707, %v707
        %712 = vrot.lane.b32.xlu0 %v583, 64
        %v713 = vpop.permute.xlu0 %712
        %v715 = vsel %vm588, %v710, 0
        %vm717 = vcmask 1043456
        %v719 = vsel %vm717, %v713, 0
        %721 = vmatprep.subr.bf16.mxu0 0
        %722 = vmatpush1.bf16.msra.mxu0 %v719
        %723 = vmatprep.subr.bf16.mxu0 0
        %724 = vmatpush1.bf16.msra.mxu0 0
        %725 = vmatprep.subr.bf16.mxu0 0
        %726 = vmatpush1.bf16.msra.mxu0 0
        %727 = vmatprep.subr.bf16.mxu0 0
        %728 = vmatpush1.bf16.msra.mxu0 0
        %729 = vmatprep.subr.bf16.mxu0 0
        %730 = vmatpush1.bf16.msra.mxu0 0
        %731 = vmatprep.subr.bf16.mxu0 0
        %732 = vmatpush1.bf16.msra.mxu0 0
        %733 = vmatprep.subr.bf16.mxu0 0
        %734 = vmatpush1.bf16.msra.mxu0 0
        %735 = vmatprep.subr.bf16.mxu0 0
        %736 = vmatpush1.bf16.msra.mxu0 0
        %737 = vmatprep.subr.bf16.mxu0 0
        %738 = vmatpush1.bf16.msra.mxu0 0
        %739 = vmatprep.subr.bf16.mxu0 0
        %740 = vmatpush1.bf16.msra.mxu0 0
        %741 = vmatprep.subr.bf16.mxu0 0
        %742 = vmatpush1.bf16.msra.mxu0 0
        %743 = vmatprep.subr.bf16.mxu0 0
        %744 = vmatpush1.bf16.msra.mxu0 0
        %745 = vmatprep.subr.bf16.mxu0 0
        %746 = vmatpush1.bf16.msra.mxu0 0
        %747 = vmatprep.subr.bf16.mxu0 0
        %748 = vmatpush1.bf16.msra.mxu0 0
        %749 = vmatprep.subr.bf16.mxu0 0
        %750 = vmatpush1.bf16.msra.mxu0 0
        %751 = vmatprep.subr.bf16.mxu0 0
        %752 = vmatpush1.bf16.msra.mxu0 0
        %753 = vmatprep.mubr.bf16.mxu0 0
        %754 = vmatmul.mubr.bf16.gmra.mrb[0].mxu0 %v715
        %v755 = vpop.f32.mrb[0].mxu0
        %v756 = vadd.f32 0.0, %v755
        %v757 = vpop.f32.mrb[0].mxu0
        %v758 = vpop.f32.mrb[0].mxu0
        %v759 = vpop.f32.mrb[0].mxu0
        %760 = vdwg.mxu0
        %761 = vrot.lane.b32.xlu0 %v584, 64
        %v762 = vpop.permute.xlu0 %761
        %v764 = vsel %vm588, %v711, 0
        %v767 = vsel %vm717, %v762, 0
        %769 = vmatprep.subr.bf16.mxu0 0
        %770 = vmatpush1.bf16.msra.mxu0 %v767
        %771 = vmatprep.subr.bf16.mxu0 0
        %772 = vmatpush1.bf16.msra.mxu0 0
        %773 = vmatprep.subr.bf16.mxu0 0
        %774 = vmatpush1.bf16.msra.mxu0 0
        %775 = vmatprep.subr.bf16.mxu0 0
        %776 = vmatpush1.bf16.msra.mxu0 0
        %777 = vmatprep.subr.bf16.mxu0 0
        %778 = vmatpush1.bf16.msra.mxu0 0
        %779 = vmatprep.subr.bf16.mxu0 0
        %780 = vmatpush1.bf16.msra.mxu0 0
        %781 = vmatprep.subr.bf16.mxu0 0
        %782 = vmatpush1.bf16.msra.mxu0 0
        %783 = vmatprep.subr.bf16.mxu0 0
        %784 = vmatpush1.bf16.msra.mxu0 0
        %785 = vmatprep.subr.bf16.mxu0 0
        %786 = vmatpush1.bf16.msra.mxu0 0
        %787 = vmatprep.subr.bf16.mxu0 0
        %788 = vmatpush1.bf16.msra.mxu0 0
        %789 = vmatprep.subr.bf16.mxu0 0
        %790 = vmatpush1.bf16.msra.mxu0 0
        %791 = vmatprep.subr.bf16.mxu0 0
        %792 = vmatpush1.bf16.msra.mxu0 0
        %793 = vmatprep.subr.bf16.mxu0 0
        %794 = vmatpush1.bf16.msra.mxu0 0
        %795 = vmatprep.subr.bf16.mxu0 0
        %796 = vmatpush1.bf16.msra.mxu0 0
        %797 = vmatprep.subr.bf16.mxu0 0
        %798 = vmatpush1.bf16.msra.mxu0 0
        %799 = vmatprep.subr.bf16.mxu0 0
        %800 = vmatpush1.bf16.msra.mxu0 0
        %801 = vmatprep.mubr.bf16.mxu0 0
        %802 = vmatmul.mubr.bf16.gmra.mrb[0].mxu0 %v764
        %v803 = vpop.f32.mrb[0].mxu0
        %v804 = vadd.f32 0.0, %v803
        %v805 = vpop.f32.mrb[0].mxu0
        %v806 = vpop.f32.mrb[0].mxu0
        %v807 = vpop.f32.mrb[0].mxu0
        %808 = vdwg.mxu0
        %v809 = vpack.c.bf16 %v804, %v756
        %810 = vst.msk [vmem:[#allocation2] sm:$0xff] %vm588, %v809
        %811 = vrot.lane.b32.xlu0 %v583, 120
        %v812 = vpop.permute.xlu0 %811
        %813 = vrot.lane.b32.xlu0 %v583, 88
        %v814 = vpop.permute.xlu0 %813
        %v816 = vsel %vm588, %v812, 0
        %v819 = vsel %vm588, %v814, 0
        %821 = vmatprep.subr.bf16.mxu0 0
        %822 = vmatpush1.bf16.xpose.msra.mxu0 %v819
        %823 = vmatprep.subr.bf16.mxu0 0
        %824 = vmatpush1.bf16.xpose.msra.mxu0 0
        %825 = vmatprep.subr.bf16.mxu0 0
        %826 = vmatpush1.bf16.xpose.msra.mxu0 0
        %827 = vmatprep.subr.bf16.mxu0 0
        %828 = vmatpush1.bf16.xpose.msra.mxu0 0
        %829 = vmatprep.subr.bf16.mxu0 0
        %830 = vmatpush1.bf16.xpose.msra.mxu0 0
        %831 = vmatprep.subr.bf16.mxu0 0
        %832 = vmatpush1.bf16.xpose.msra.mxu0 0
        %833 = vmatprep.subr.bf16.mxu0 0
        %834 = vmatpush1.bf16.xpose.msra.mxu0 0
        %835 = vmatprep.subr.bf16.mxu0 0
        %836 = vmatpush1.bf16.xpose.msra.mxu0 0
        %837 = vmatprep.subr.bf16.mxu0 0
        %838 = vmatpush1.bf16.xpose.msra.mxu0 0
        %839 = vmatprep.subr.bf16.mxu0 0
        %840 = vmatpush1.bf16.xpose.msra.mxu0 0
        %841 = vmatprep.subr.bf16.mxu0 0
        %842 = vmatpush1.bf16.xpose.msra.mxu0 0
        %843 = vmatprep.subr.bf16.mxu0 0
        %844 = vmatpush1.bf16.xpose.msra.mxu0 0
        %845 = vmatprep.subr.bf16.mxu0 0
        %846 = vmatpush1.bf16.xpose.msra.mxu0 0
        %847 = vmatprep.subr.bf16.mxu0 0
        %848 = vmatpush1.bf16.xpose.msra.mxu0 0
        %849 = vmatprep.subr.bf16.mxu0 0
        %850 = vmatpush1.bf16.xpose.msra.mxu0 0
        %851 = vmatprep.subr.bf16.mxu0 0
        %852 = vmatpush1.bf16.xpose.msra.mxu0 0
        %853 = vmatprep.mubr.bf16.mxu0 0
        %854 = vmatmul.mubr.bf16.gmra.mrb[0].mxu0 %v816
        %v855 = vpop.f32.mrb[0].mxu0
        %v856 = vadd.f32 0.0, %v855
        %v857 = vpop.f32.mrb[0].mxu0
        %v858 = vpop.f32.mrb[0].mxu0
        %v859 = vpop.f32.mrb[0].mxu0
        %860 = vdwg.mxu0
        %861 = vrot.lane.b32.xlu0 %v584, 120
        %v862 = vpop.permute.xlu0 %861
        %863 = vrot.lane.b32.xlu0 %v584, 88
        %v864 = vpop.permute.xlu0 %863
        %v866 = vsel %vm588, %v862, 0
        %v869 = vsel %vm588, %v864, 0
        %871 = vmatprep.subr.bf16.mxu0 0
        %872 = vmatpush1.bf16.xpose.msra.mxu0 %v869
        %873 = vmatprep.subr.bf16.mxu0 0
        %874 = vmatpush1.bf16.xpose.msra.mxu0 0
        %875 = vmatprep.subr.bf16.mxu0 0
        %876 = vmatpush1.bf16.xpose.msra.mxu0 0
        %877 = vmatprep.subr.bf16.mxu0 0
        %878 = vmatpush1.bf16.xpose.msra.mxu0 0
        %879 = vmatprep.subr.bf16.mxu0 0
        %880 = vmatpush1.bf16.xpose.msra.mxu0 0
        %881 = vmatprep.subr.bf16.mxu0 0
        %882 = vmatpush1.bf16.xpose.msra.mxu0 0
        %883 = vmatprep.subr.bf16.mxu0 0
        %884 = vmatpush1.bf16.xpose.msra.mxu0 0
        %885 = vmatprep.subr.bf16.mxu0 0
        %886 = vmatpush1.bf16.xpose.msra.mxu0 0
        %887 = vmatprep.subr.bf16.mxu0 0
        %888 = vmatpush1.bf16.xpose.msra.mxu0 0
        %889 = vmatprep.subr.bf16.mxu0 0
        %890 = vmatpush1.bf16.xpose.msra.mxu0 0
        %891 = vmatprep.subr.bf16.mxu0 0
        %892 = vmatpush1.bf16.xpose.msra.mxu0 0
        %893 = vmatprep.subr.bf16.mxu0 0
        %894 = vmatpush1.bf16.xpose.msra.mxu0 0
        %895 = vmatprep.subr.bf16.mxu0 0
        %896 = vmatpush1.bf16.xpose.msra.mxu0 0
        %897 = vmatprep.subr.bf16.mxu0 0
        %898 = vmatpush1.bf16.xpose.msra.mxu0 0
        %899 = vmatprep.subr.bf16.mxu0 0
        %900 = vmatpush1.bf16.xpose.msra.mxu0 0
        %901 = vmatprep.subr.bf16.mxu0 0
        %902 = vmatpush1.bf16.xpose.msra.mxu0 0
        %903 = vmatprep.mubr.bf16.mxu0 0
        %904 = vmatmul.mubr.bf16.gmra.mrb[0].mxu0 %v866
        %v905 = vpop.f32.mrb[0].mxu0
        %v906 = vadd.f32 0.0, %v905
        %v907 = vpop.f32.mrb[0].mxu0
        %v908 = vpop.f32.mrb[0].mxu0
        %v909 = vpop.f32.mrb[0].mxu0
        %910 = vdwg.mxu0
        %v911 = vmul.f32 %v856, 0.35355338
        %v912 = vmul.f32 %v906, 0.35355338
        %v913 = vsel %vm588, %v911, -inf
        %914 = vmax.xlane.f32.xlu0 %v913
        %v915 = vpop.xlane.xlu0 %914
        %v916 = vsel %vm588, %v912, -inf
        %917 = vmax.xlane.f32.xlu0 %v916
        %v918 = vpop.xlane.xlu0 %917
        %v919 = vsub.f32 %v911, %v915
        %v920 = vsub.f32 %v912, %v918
        %v921 = vmul.f32 %v919, 1.442695
        %v922 = vpow.pop %v921
        %v923 = vmul.f32 %v920, 1.442695
        %v924 = vpow.pop %v923
        %v925 = vsel %vm588, %v922, 0.0
        %926 = vadd.xlane.f32.xlu0 %v925
        %v927 = vpop.xlane.xlu0 %926
        %v928 = vsel %vm588, %v924, 0.0
        %929 = vadd.xlane.f32.xlu0 %v928
        %v930 = vpop.xlane.xlu0 %929
        %v931 = vrcp.pop %v927
        %v932 = vrcp.pop %v930
        %v933 = vmul.f32 %v922, %v931
        %v934 = vmul.f32 %v924, %v932
        %v935 = vadd.f32 %v708, %v933
        %v936 = vadd.f32 %v709, %v934
        %v937 = vpack.c.bf16 %v933, %v933
        %v938 = vpack.c.bf16 %v934, %v934
        %939 = vrot.lane.b32.xlu0 %v583, 56
        %v940 = vpop.permute.xlu0 %939
        %v942 = vsel %vm588, %v937, 0
        %v945 = vsel %vm717, %v940, 0
        %947 = vmatprep.subr.bf16.mxu0 0
        %948 = vmatpush1.bf16.msra.mxu0 %v945
        %949 = vmatprep.subr.bf16.mxu0 0
        %950 = vmatpush1.bf16.msra.mxu0 0
        %951 = vmatprep.subr.bf16.mxu0 0
        %952 = vmatpush1.bf16.msra.mxu0 0
        %953 = vmatprep.subr.bf16.mxu0 0
        %954 = vmatpush1.bf16.msra.mxu0 0
        %955 = vmatprep.subr.bf16.mxu0 0
        %956 = vmatpush1.bf16.msra.mxu0 0
        %957 = vmatprep.subr.bf16.mxu0 0
        %958 = vmatpush1.bf16.msra.mxu0 0
        %959 = vmatprep.subr.bf16.mxu0 0
        %960 = vmatpush1.bf16.msra.mxu0 0
        %961 = vmatprep.subr.bf16.mxu0 0
        %962 = vmatpush1.bf16.msra.mxu0 0
        %963 = vmatprep.subr.bf16.mxu0 0
        %964 = vmatpush1.bf16.msra.mxu0 0
        %965 = vmatprep.subr.bf16.mxu0 0
        %966 = vmatpush1.bf16.msra.mxu0 0
        %967 = vmatprep.subr.bf16.mxu0 0
        %968 = vmatpush1.bf16.msra.mxu0 0
        %969 = vmatprep.subr.bf16.mxu0 0
        %970 = vmatpush1.bf16.msra.mxu0 0
        %971 = vmatprep.subr.bf16.mxu0 0
        %972 = vmatpush1.bf16.msra.mxu0 0
        %973 = vmatprep.subr.bf16.mxu0 0
        %974 = vmatpush1.bf16.msra.mxu0 0
        %975 = vmatprep.subr.bf16.mxu0 0
        %976 = vmatpush1.bf16.msra.mxu0 0
        %977 = vmatprep.subr.bf16.mxu0 0
        %978 = vmatpush1.bf16.msra.mxu0 0
        %979 = vmatprep.mubr.bf16.mxu0 0
        %980 = vmatmul.mubr.bf16.gmra.mrb[0].mxu0 %v942
        %v981 = vpop.f32.mrb[0].mxu0
        %v982 = vadd.f32 0.0, %v981
        %v983 = vpop.f32.mrb[0].mxu0
        %v984 = vpop.f32.mrb[0].mxu0
        %v985 = vpop.f32.mrb[0].mxu0
        %986 = vdwg.mxu0
        %987 = vrot.lane.b32.xlu0 %v584, 56
        %v988 = vpop.permute.xlu0 %987
        %v990 = vsel %vm588, %v938, 0
        %v993 = vsel %vm717, %v988, 0
        %995 = vmatprep.subr.bf16.mxu0 0
        %996 = vmatpush1.bf16.msra.mxu0 %v993
        %997 = vmatprep.subr.bf16.mxu0 0
        %998 = vmatpush1.bf16.msra.mxu0 0
        %999 = vmatprep.subr.bf16.mxu0 0
        %1000 = vmatpush1.bf16.msra.mxu0 0
        %1001 = vmatprep.subr.bf16.mxu0 0
        %1002 = vmatpush1.bf16.msra.mxu0 0
        %1003 = vmatprep.subr.bf16.mxu0 0
        %1004 = vmatpush1.bf16.msra.mxu0 0
        %1005 = vmatprep.subr.bf16.mxu0 0
        %1006 = vmatpush1.bf16.msra.mxu0 0
        %1007 = vmatprep.subr.bf16.mxu0 0
        %1008 = vmatpush1.bf16.msra.mxu0 0
        %1009 = vmatprep.subr.bf16.mxu0 0
        %1010 = vmatpush1.bf16.msra.mxu0 0
        %1011 = vmatprep.subr.bf16.mxu0 0
        %1012 = vmatpush1.bf16.msra.mxu0 0
        %1013 = vmatprep.subr.bf16.mxu0 0
        %1014 = vmatpush1.bf16.msra.mxu0 0
        %1015 = vmatprep.subr.bf16.mxu0 0
        %1016 = vmatpush1.bf16.msra.mxu0 0
        %1017 = vmatprep.subr.bf16.mxu0 0
        %1018 = vmatpush1.bf16.msra.mxu0 0
        %1019 = vmatprep.subr.bf16.mxu0 0
        %1020 = vmatpush1.bf16.msra.mxu0 0
        %1021 = vmatprep.subr.bf16.mxu0 0
        %1022 = vmatpush1.bf16.msra.mxu0 0
        %1023 = vmatprep.subr.bf16.mxu0 0
        %1024 = vmatpush1.bf16.msra.mxu0 0
        %1025 = vmatprep.subr.bf16.mxu0 0
        %1026 = vmatpush1.bf16.msra.mxu0 0
        %1027 = vmatprep.mubr.bf16.mxu0 0
        %1028 = vmatmul.mubr.bf16.gmra.mrb[0].mxu0 %v990
        %v1029 = vpop.f32.mrb[0].mxu0
        %v1030 = vadd.f32 0.0, %v1029
        %v1031 = vpop.f32.mrb[0].mxu0
        %v1032 = vpop.f32.mrb[0].mxu0
        %v1033 = vpop.f32.mrb[0].mxu0
        %1034 = vdwg.mxu0
        %v1035 = vpack.c.bf16 %v1030, %v982
        %1037 = vrot.lane.b32.xlu0 %v1035, 8
        %v1038 = vpop.permute.xlu0 %1037
        %vm1040 = vcmask 130112
        %1041 = vst.msk [vmem:[#allocation2] sm:$0xff] %vm1040, %v1038
        %1042 = vrot.lane.b32.xlu0 %v583, 112
        %v1043 = vpop.permute.xlu0 %1042
        %1044 = vrot.lane.b32.xlu0 %v583, 80
        %v1045 = vpop.permute.xlu0 %1044
        %v1047 = vsel %vm588, %v1043, 0
        %v1050 = vsel %vm588, %v1045, 0
        %1052 = vmatprep.subr.bf16.mxu0 0
        %1053 = vmatpush1.bf16.xpose.msra.mxu0 %v1050
        %1054 = vmatprep.subr.bf16.mxu0 0
        %1055 = vmatpush1.bf16.xpose.msra.mxu0 0
        %1056 = vmatprep.subr.bf16.mxu0 0
        %1057 = vmatpush1.bf16.xpose.msra.mxu0 0
        %1058 = vmatprep.subr.bf16.mxu0 0
        %1059 = vmatpush1.bf16.xpose.msra.mxu0 0
        %1060 = vmatprep.subr.bf16.mxu0 0
        %1061 = vmatpush1.bf16.xpose.msra.mxu0 0
        %1062 = vmatprep.subr.bf16.mxu0 0
        %1063 = vmatpush1.bf16.xpose.msra.mxu0 0
        %1064 = vmatprep.subr.bf16.mxu0 0
        %1065 = vmatpush1.bf16.xpose.msra.mxu0 0
        %1066 = vmatprep.subr.bf16.mxu0 0
        %1067 = vmatpush1.bf16.xpose.msra.mxu0 0
        %1068 = vmatprep.subr.bf16.mxu0 0
        %1069 = vmatpush1.bf16.xpose.msra.mxu0 0
        %1070 = vmatprep.subr.bf16.mxu0 0
        %1071 = vmatpush1.bf16.xpose.msra.mxu0 0
        %1072 = vmatprep.subr.bf16.mxu0 0
        %1073 = vmatpush1.bf16.xpose.msra.mxu0 0
        %1074 = vmatprep.subr.bf16.mxu0 0
        %1075 = vmatpush1.bf16.xpose.msra.mxu0 0
        %1076 = vmatprep.subr.bf16.mxu0 0
        %1077 = vmatpush1.bf16.xpose.msra.mxu0 0
        %1078 = vmatprep.subr.bf16.mxu0 0
        %1079 = vmatpush1.bf16.xpose.msra.mxu0 0
        %1080 = vmatprep.subr.bf16.mxu0 0
        %1081 = vmatpush1.bf16.xpose.msra.mxu0 0
        %1082 = vmatprep.subr.bf16.mxu0 0
        %1083 = vmatpush1.bf16.xpose.msra.mxu0 0
        %1084 = vmatprep.mubr.bf16.mxu0 0
        %1085 = vmatmul.mubr.bf16.gmra.mrb[0].mxu0 %v1047
        %v1086 = vpop.f32.mrb[0].mxu0
        %v1087 = vadd.f32 0.0, %v1086
        %v1088 = vpop.f32.mrb[0].mxu0
        %v1089 = vpop.f32.mrb[0].mxu0
        %v1090 = vpop.f32.mrb[0].mxu0
        %1091 = vdwg.mxu0
        %1092 = vrot.lane.b32.xlu0 %v584, 112
        %v1093 = vpop.permute.xlu0 %1092
        %1094 = vrot.lane.b32.xlu0 %v584, 80
        %v1095 = vpop.permute.xlu0 %1094
        %v1097 = vsel %vm588, %v1093, 0
        %v1100 = vsel %vm588, %v1095, 0
        %1102 = vmatprep.subr.bf16.mxu0 0
        %1103 = vmatpush1.bf16.xpose.msra.mxu0 %v1100
        %1104 = vmatprep.subr.bf16.mxu0 0
        %1105 = vmatpush1.bf16.xpose.msra.mxu0 0
        %1106 = vmatprep.subr.bf16.mxu0 0
        %1107 = vmatpush1.bf16.xpose.msra.mxu0 0
        %1108 = vmatprep.subr.bf16.mxu0 0
        %1109 = vmatpush1.bf16.xpose.msra.mxu0 0
        %1110 = vmatprep.subr.bf16.mxu0 0
        %1111 = vmatpush1.bf16.xpose.msra.mxu0 0
        %1112 = vmatprep.subr.bf16.mxu0 0
        %1113 = vmatpush1.bf16.xpose.msra.mxu0 0
        %1114 = vmatprep.subr.bf16.mxu0 0
        %1115 = vmatpush1.bf16.xpose.msra.mxu0 0
        %1116 = vmatprep.subr.bf16.mxu0 0
        %1117 = vmatpush1.bf16.xpose.msra.mxu0 0
        %1118 = vmatprep.subr.bf16.mxu0 0
        %1119 = vmatpush1.bf16.xpose.msra.mxu0 0
        %1120 = vmatprep.subr.bf16.mxu0 0
        %1121 = vmatpush1.bf16.xpose.msra.mxu0 0
        %1122 = vmatprep.subr.bf16.mxu0 0
        %1123 = vmatpush1.bf16.xpose.msra.mxu0 0
        %1124 = vmatprep.subr.bf16.mxu0 0
        %1125 = vmatpush1.bf16.xpose.msra.mxu0 0
        %1126 = vmatprep.subr.bf16.mxu0 0
        %1127 = vmatpush1.bf16.xpose.msra.mxu0 0
        %1128 = vmatprep.subr.bf16.mxu0 0
        %1129 = vmatpush1.bf16.xpose.msra.mxu0 0
        %1130 = vmatprep.subr.bf16.mxu0 0
        %1131 = vmatpush1.bf16.xpose.msra.mxu0 0
        %1132 = vmatprep.subr.bf16.mxu0 0
        %1133 = vmatpush1.bf16.xpose.msra.mxu0 0
        %1134 = vmatprep.mubr.bf16.mxu0 0
        %1135 = vmatmul.mubr.bf16.gmra.mrb[0].mxu0 %v1097
        %v1136 = vpop.f32.mrb[0].mxu0
        %v1137 = vadd.f32 0.0, %v1136
        %v1138 = vpop.f32.mrb[0].mxu0
        %v1139 = vpop.f32.mrb[0].mxu0
        %v1140 = vpop.f32.mrb[0].mxu0
        %1141 = vdwg.mxu0
        %v1142 = vmul.f32 %v1087, 0.35355338
        %v1143 = vmul.f32 %v1137, 0.35355338
        %v1144 = vsel %vm588, %v1142, -inf
        %1145 = vmax.xlane.f32.xlu0 %v1144
        %v1146 = vpop.xlane.xlu0 %1145
        %v1147 = vsel %vm588, %v1143, -inf
        %1148 = vmax.xlane.f32.xlu0 %v1147
        %v1149 = vpop.xlane.xlu0 %1148
        %v1150 = vsub.f32 %v1142, %v1146
        %v1151 = vsub.f32 %v1143, %v1149
        %v1152 = vmul.f32 %v1150, 1.442695
        %v1153 = vpow.pop %v1152
        %v1154 = vmul.f32 %v1151, 1.442695
        %v1155 = vpow.pop %v1154
        %v1156 = vsel %vm588, %v1153, 0.0
        %1157 = vadd.xlane.f32.xlu0 %v1156
        %v1158 = vpop.xlane.xlu0 %1157
        %v1159 = vsel %vm588, %v1155, 0.0
        %1160 = vadd.xlane.f32.xlu0 %v1159
        %v1161 = vpop.xlane.xlu0 %1160
        %v1162 = vrcp.pop %v1158
        %v1163 = vrcp.pop %v1161
        %v1164 = vmul.f32 %v1153, %v1162
        %v1165 = vmul.f32 %v1155, %v1163
        %v1166 = vadd.f32 %v935, %v1164
        %v1167 = vadd.f32 %v936, %v1165
        %v1168 = vpack.c.bf16 %v1164, %v1164
        %v1169 = vpack.c.bf16 %v1165, %v1165
        %1170 = vrot.lane.b32.xlu0 %v583, 48
        %v1171 = vpop.permute.xlu0 %1170
        %v1173 = vsel %vm588, %v1168, 0
        %v1176 = vsel %vm717, %v1171, 0
        %1178 = vmatprep.subr.bf16.mxu0 0
        %1179 = vmatpush1.bf16.msra.mxu0 %v1176
        %1180 = vmatprep.subr.bf16.mxu0 0
        %1181 = vmatpush1.bf16.msra.mxu0 0
        %1182 = vmatprep.subr.bf16.mxu0 0
        %1183 = vmatpush1.bf16.msra.mxu0 0
        %1184 = vmatprep.subr.bf16.mxu0 0
        %1185 = vmatpush1.bf16.msra.mxu0 0
        %1186 = vmatprep.subr.bf16.mxu0 0
        %1187 = vmatpush1.bf16.msra.mxu0 0
        %1188 = vmatprep.subr.bf16.mxu0 0
        %1189 = vmatpush1.bf16.msra.mxu0 0
        %1190 = vmatprep.subr.bf16.mxu0 0
        %1191 = vmatpush1.bf16.msra.mxu0 0
        %1192 = vmatprep.subr.bf16.mxu0 0
        %1193 = vmatpush1.bf16.msra.mxu0 0
        %1194 = vmatprep.subr.bf16.mxu0 0
        %1195 = vmatpush1.bf16.msra.mxu0 0
        %1196 = vmatprep.subr.bf16.mxu0 0
        %1197 = vmatpush1.bf16.msra.mxu0 0
        %1198 = vmatprep.subr.bf16.mxu0 0
        %1199 = vmatpush1.bf16.msra.mxu0 0
        %1200 = vmatprep.subr.bf16.mxu0 0
        %1201 = vmatpush1.bf16.msra.mxu0 0
        %1202 = vmatprep.subr.bf16.mxu0 0
        %1203 = vmatpush1.bf16.msra.mxu0 0
        %1204 = vmatprep.subr.bf16.mxu0 0
        %1205 = vmatpush1.bf16.msra.mxu0 0
        %1206 = vmatprep.subr.bf16.mxu0 0
        %1207 = vmatpush1.bf16.msra.mxu0 0
        %1208 = vmatprep.subr.bf16.mxu0 0
        %1209 = vmatpush1.bf16.msra.mxu0 0
        %1210 = vmatprep.mubr.bf16.mxu0 0
        %1211 = vmatmul.mubr.bf16.gmra.mrb[0].mxu0 %v1173
        %v1212 = vpop.f32.mrb[0].mxu0
        %v1213 = vadd.f32 0.0, %v1212
        %v1214 = vpop.f32.mrb[0].mxu0
        %v1215 = vpop.f32.mrb[0].mxu0
        %v1216 = vpop.f32.mrb[0].mxu0
        %1217 = vdwg.mxu0
        %1218 = vrot.lane.b32.xlu0 %v584, 48
        %v1219 = vpop.permute.xlu0 %1218
        %v1221 = vsel %vm588, %v1169, 0
        %v1224 = vsel %vm717, %v1219, 0
        %1226 = vmatprep.subr.bf16.mxu0 0
        %1227 = vmatpush1.bf16.msra.mxu0 %v1224
        %1228 = vmatprep.subr.bf16.mxu0 0
        %1229 = vmatpush1.bf16.msra.mxu0 0
        %1230 = vmatprep.subr.bf16.mxu0 0
        %1231 = vmatpush1.bf16.msra.mxu0 0
        %1232 = vmatprep.subr.bf16.mxu0 0
        %1233 = vmatpush1.bf16.msra.mxu0 0
        %1234 = vmatprep.subr.bf16.mxu0 0
        %1235 = vmatpush1.bf16.msra.mxu0 0
        %1236 = vmatprep.subr.bf16.mxu0 0
        %1237 = vmatpush1.bf16.msra.mxu0 0
        %1238 = vmatprep.subr.bf16.mxu0 0
        %1239 = vmatpush1.bf16.msra.mxu0 0
        %1240 = vmatprep.subr.bf16.mxu0 0
        %1241 = vmatpush1.bf16.msra.mxu0 0
        %1242 = vmatprep.subr.bf16.mxu0 0
        %1243 = vmatpush1.bf16.msra.mxu0 0
        %1244 = vmatprep.subr.bf16.mxu0 0
        %1245 = vmatpush1.bf16.msra.mxu0 0
        %1246 = vmatprep.subr.bf16.mxu0 0
        %1247 = vmatpush1.bf16.msra.mxu0 0
        %1248 = vmatprep.subr.bf16.mxu0 0
        %1249 = vmatpush1.bf16.msra.mxu0 0
        %1250 = vmatprep.subr.bf16.mxu0 0
        %1251 = vmatpush1.bf16.msra.mxu0 0
        %1252 = vmatprep.subr.bf16.mxu0 0
        %1253 = vmatpush1.bf16.msra.mxu0 0
        %1254 = vmatprep.subr.bf16.mxu0 0
        %1255 = vmatpush1.bf16.msra.mxu0 0
        %1256 = vmatprep.subr.bf16.mxu0 0
        %1257 = vmatpush1.bf16.msra.mxu0 0
        %1258 = vmatprep.mubr.bf16.mxu0 0
        %1259 = vmatmul.mubr.bf16.gmra.mrb[0].mxu0 %v1221
        %v1260 = vpop.f32.mrb[0].mxu0
        %v1261 = vadd.f32 0.0, %v1260
        %v1262 = vpop.f32.mrb[0].mxu0
        %v1263 = vpop.f32.mrb[0].mxu0
        %v1264 = vpop.f32.mrb[0].mxu0
        %1265 = vdwg.mxu0
        %v1266 = vpack.c.bf16 %v1261, %v1213
        %1268 = vrot.lane.b32.xlu0 %v1266, 16
        %v1269 = vpop.permute.xlu0 %1268
        %vm1271 = vcmask 195712
        %1272 = vst.msk [vmem:[#allocation2] sm:$0xff] %vm1271, %v1269
        %1273 = vrot.lane.b32.xlu0 %v583, 104
        %v1274 = vpop.permute.xlu0 %1273
        %1275 = vrot.lane.b32.xlu0 %v583, 72
        %v1276 = vpop.permute.xlu0 %1275
        %v1278 = vsel %vm588, %v1274, 0
        %v1281 = vsel %vm588, %v1276, 0
        %1283 = vmatprep.subr.bf16.mxu0 0
        %1284 = vmatpush1.bf16.xpose.msra.mxu0 %v1281
        %1285 = vmatprep.subr.bf16.mxu0 0
        %1286 = vmatpush1.bf16.xpose.msra.mxu0 0
        %1287 = vmatprep.subr.bf16.mxu0 0
        %1288 = vmatpush1.bf16.xpose.msra.mxu0 0
        %1289 = vmatprep.subr.bf16.mxu0 0
        %1290 = vmatpush1.bf16.xpose.msra.mxu0 0
        %1291 = vmatprep.subr.bf16.mxu0 0
        %1292 = vmatpush1.bf16.xpose.msra.mxu0 0
        %1293 = vmatprep.subr.bf16.mxu0 0
        %1294 = vmatpush1.bf16.xpose.msra.mxu0 0
        %1295 = vmatprep.subr.bf16.mxu0 0
        %1296 = vmatpush1.bf16.xpose.msra.mxu0 0
        %1297 = vmatprep.subr.bf16.mxu0 0
        %1298 = vmatpush1.bf16.xpose.msra.mxu0 0
        %1299 = vmatprep.subr.bf16.mxu0 0
        %1300 = vmatpush1.bf16.xpose.msra.mxu0 0
        %1301 = vmatprep.subr.bf16.mxu0 0
        %1302 = vmatpush1.bf16.xpose.msra.mxu0 0
        %1303 = vmatprep.subr.bf16.mxu0 0
        %1304 = vmatpush1.bf16.xpose.msra.mxu0 0
        %1305 = vmatprep.subr.bf16.mxu0 0
        %1306 = vmatpush1.bf16.xpose.msra.mxu0 0
        %1307 = vmatprep.subr.bf16.mxu0 0
        %1308 = vmatpush1.bf16.xpose.msra.mxu0 0
        %1309 = vmatprep.subr.bf16.mxu0 0
        %1310 = vmatpush1.bf16.xpose.msra.mxu0 0
        %1311 = vmatprep.subr.bf16.mxu0 0
        %1312 = vmatpush1.bf16.xpose.msra.mxu0 0
        %1313 = vmatprep.subr.bf16.mxu0 0
        %1314 = vmatpush1.bf16.xpose.msra.mxu0 0
        %1315 = vmatprep.mubr.bf16.mxu0 0
        %1316 = vmatmul.mubr.bf16.gmra.mrb[0].mxu0 %v1278
        %v1317 = vpop.f32.mrb[0].mxu0
        %v1318 = vadd.f32 0.0, %v1317
        %v1319 = vpop.f32.mrb[0].mxu0
        %v1320 = vpop.f32.mrb[0].mxu0
        %v1321 = vpop.f32.mrb[0].mxu0
        %1322 = vdwg.mxu0
        %1323 = vrot.lane.b32.xlu0 %v584, 104
        %v1324 = vpop.permute.xlu0 %1323
        %1325 = vrot.lane.b32.xlu0 %v584, 72
        %v1326 = vpop.permute.xlu0 %1325
        %v1328 = vsel %vm588, %v1324, 0
        %v1331 = vsel %vm588, %v1326, 0
        %1333 = vmatprep.subr.bf16.mxu0 0
        %1334 = vmatpush1.bf16.xpose.msra.mxu0 %v1331
        %1335 = vmatprep.subr.bf16.mxu0 0
        %1336 = vmatpush1.bf16.xpose.msra.mxu0 0
        %1337 = vmatprep.subr.bf16.mxu0 0
        %1338 = vmatpush1.bf16.xpose.msra.mxu0 0
        %1339 = vmatprep.subr.bf16.mxu0 0
        %1340 = vmatpush1.bf16.xpose.msra.mxu0 0
        %1341 = vmatprep.subr.bf16.mxu0 0
        %1342 = vmatpush1.bf16.xpose.msra.mxu0 0
        %1343 = vmatprep.subr.bf16.mxu0 0
        %1344 = vmatpush1.bf16.xpose.msra.mxu0 0
        %1345 = vmatprep.subr.bf16.mxu0 0
        %1346 = vmatpush1.bf16.xpose.msra.mxu0 0
        %1347 = vmatprep.subr.bf16.mxu0 0
        %1348 = vmatpush1.bf16.xpose.msra.mxu0 0
        %1349 = vmatprep.subr.bf16.mxu0 0
        %1350 = vmatpush1.bf16.xpose.msra.mxu0 0
        %1351 = vmatprep.subr.bf16.mxu0 0
        %1352 = vmatpush1.bf16.xpose.msra.mxu0 0
        %1353 = vmatprep.subr.bf16.mxu0 0
        %1354 = vmatpush1.bf16.xpose.msra.mxu0 0
        %1355 = vmatprep.subr.bf16.mxu0 0
        %1356 = vmatpush1.bf16.xpose.msra.mxu0 0
        %1357 = vmatprep.subr.bf16.mxu0 0
        %1358 = vmatpush1.bf16.xpose.msra.mxu0 0
        %1359 = vmatprep.subr.bf16.mxu0 0
        %1360 = vmatpush1.bf16.xpose.msra.mxu0 0
        %1361 = vmatprep.subr.bf16.mxu0 0
        %1362 = vmatpush1.bf16.xpose.msra.mxu0 0
        %1363 = vmatprep.subr.bf16.mxu0 0
        %1364 = vmatpush1.bf16.xpose.msra.mxu0 0
        %1365 = vmatprep.mubr.bf16.mxu0 0
        %1366 = vmatmul.mubr.bf16.gmra.mrb[0].mxu0 %v1328
        %v1367 = vpop.f32.mrb[0].mxu0
        %v1368 = vadd.f32 0.0, %v1367
        %v1369 = vpop.f32.mrb[0].mxu0
        %v1370 = vpop.f32.mrb[0].mxu0
        %v1371 = vpop.f32.mrb[0].mxu0
        %1372 = vdwg.mxu0
        %v1373 = vmul.f32 %v1318, 0.35355338
        %v1374 = vmul.f32 %v1368, 0.35355338
        %v1375 = vsel %vm588, %v1373, -inf
        %1376 = vmax.xlane.f32.xlu0 %v1375
        %v1377 = vpop.xlane.xlu0 %1376
        %v1378 = vsel %vm588, %v1374, -inf
        %1379 = vmax.xlane.f32.xlu0 %v1378
        %v1380 = vpop.xlane.xlu0 %1379
        %v1381 = vsub.f32 %v1373, %v1377
        %v1382 = vsub.f32 %v1374, %v1380
        %v1383 = vmul.f32 %v1381, 1.442695
        %v1384 = vpow.pop %v1383
        %v1385 = vmul.f32 %v1382, 1.442695
        %v1386 = vpow.pop %v1385
        %v1387 = vsel %vm588, %v1384, 0.0
        %1388 = vadd.xlane.f32.xlu0 %v1387
        %v1389 = vpop.xlane.xlu0 %1388
        %v1390 = vsel %vm588, %v1386, 0.0
        %1391 = vadd.xlane.f32.xlu0 %v1390
        %v1392 = vpop.xlane.xlu0 %1391
        %v1393 = vrcp.pop %v1389
        %v1394 = vrcp.pop %v1392
        %v1395 = vmul.f32 %v1384, %v1393
        %v1396 = vmul.f32 %v1386, %v1394
        %v1397 = vadd.f32 %v1166, %v1395
        %v1398 = vadd.f32 %v1167, %v1396
        %v1399 = vpack.c.bf16 %v1395, %v1395
        %v1400 = vpack.c.bf16 %v1396, %v1396
        %1401 = vrot.lane.b32.xlu0 %v583, 40
        %v1402 = vpop.permute.xlu0 %1401
        %v1404 = vsel %vm588, %v1399, 0
        %v1407 = vsel %vm717, %v1402, 0
        %1409 = vmatprep.subr.bf16.mxu0 0
        %1410 = vmatpush1.bf16.msra.mxu0 %v1407
        %1411 = vmatprep.subr.bf16.mxu0 0
        %1412 = vmatpush1.bf16.msra.mxu0 0
        %1413 = vmatprep.subr.bf16.mxu0 0
        %1414 = vmatpush1.bf16.msra.mxu0 0
        %1415 = vmatprep.subr.bf16.mxu0 0
        %1416 = vmatpush1.bf16.msra.mxu0 0
        %1417 = vmatprep.subr.bf16.mxu0 0
        %1418 = vmatpush1.bf16.msra.mxu0 0
        %1419 = vmatprep.subr.bf16.mxu0 0
        %1420 = vmatpush1.bf16.msra.mxu0 0
        %1421 = vmatprep.subr.bf16.mxu0 0
        %1422 = vmatpush1.bf16.msra.mxu0 0
        %1423 = vmatprep.subr.bf16.mxu0 0
        %1424 = vmatpush1.bf16.msra.mxu0 0
        %1425 = vmatprep.subr.bf16.mxu0 0
        %1426 = vmatpush1.bf16.msra.mxu0 0
        %1427 = vmatprep.subr.bf16.mxu0 0
        %1428 = vmatpush1.bf16.msra.mxu0 0
        %1429 = vmatprep.subr.bf16.mxu0 0
        %1430 = vmatpush1.bf16.msra.mxu0 0
        %1431 = vmatprep.subr.bf16.mxu0 0
        %1432 = vmatpush1.bf16.msra.mxu0 0
        %1433 = vmatprep.subr.bf16.mxu0 0
        %1434 = vmatpush1.bf16.msra.mxu0 0
        %1435 = vmatprep.subr.bf16.mxu0 0
        %1436 = vmatpush1.bf16.msra.mxu0 0
        %1437 = vmatprep.subr.bf16.mxu0 0
        %1438 = vmatpush1.bf16.msra.mxu0 0
        %1439 = vmatprep.subr.bf16.mxu0 0
        %1440 = vmatpush1.bf16.msra.mxu0 0
        %1441 = vmatprep.mubr.bf16.mxu0 0
        %1442 = vmatmul.mubr.bf16.gmra.mrb[0].mxu0 %v1404
        %v1443 = vpop.f32.mrb[0].mxu0
        %v1444 = vadd.f32 0.0, %v1443
        %v1445 = vpop.f32.mrb[0].mxu0
        %v1446 = vpop.f32.mrb[0].mxu0
        %v1447 = vpop.f32.mrb[0].mxu0
        %1448 = vdwg.mxu0
        %1449 = vrot.lane.b32.xlu0 %v584, 40
        %v1450 = vpop.permute.xlu0 %1449
        %v1452 = vsel %vm588, %v1400, 0
        %v1455 = vsel %vm717, %v1450, 0
        %1457 = vmatprep.subr.bf16.mxu0 0
        %1458 = vmatpush1.bf16.msra.mxu0 %v1455
        %1459 = vmatprep.subr.bf16.mxu0 0
        %1460 = vmatpush1.bf16.msra.mxu0 0
        %1461 = vmatprep.subr.bf16.mxu0 0
        %1462 = vmatpush1.bf16.msra.mxu0 0
        %1463 = vmatprep.subr.bf16.mxu0 0
        %1464 = vmatpush1.bf16.msra.mxu0 0
        %1465 = vmatprep.subr.bf16.mxu0 0
        %1466 = vmatpush1.bf16.msra.mxu0 0
        %1467 = vmatprep.subr.bf16.mxu0 0
        %1468 = vmatpush1.bf16.msra.mxu0 0
        %1469 = vmatprep.subr.bf16.mxu0 0
        %1470 = vmatpush1.bf16.msra.mxu0 0
        %1471 = vmatprep.subr.bf16.mxu0 0
        %1472 = vmatpush1.bf16.msra.mxu0 0
        %1473 = vmatprep.subr.bf16.mxu0 0
        %1474 = vmatpush1.bf16.msra.mxu0 0
        %1475 = vmatprep.subr.bf16.mxu0 0
        %1476 = vmatpush1.bf16.msra.mxu0 0
        %1477 = vmatprep.subr.bf16.mxu0 0
        %1478 = vmatpush1.bf16.msra.mxu0 0
        %1479 = vmatprep.subr.bf16.mxu0 0
        %1480 = vmatpush1.bf16.msra.mxu0 0
        %1481 = vmatprep.subr.bf16.mxu0 0
        %1482 = vmatpush1.bf16.msra.mxu0 0
        %1483 = vmatprep.subr.bf16.mxu0 0
        %1484 = vmatpush1.bf16.msra.mxu0 0
        %1485 = vmatprep.subr.bf16.mxu0 0
        %1486 = vmatpush1.bf16.msra.mxu0 0
        %1487 = vmatprep.subr.bf16.mxu0 0
        %1488 = vmatpush1.bf16.msra.mxu0 0
        %1489 = vmatprep.mubr.bf16.mxu0 0
        %1490 = vmatmul.mubr.bf16.gmra.mrb[0].mxu0 %v1452
        %v1491 = vpop.f32.mrb[0].mxu0
        %v1492 = vadd.f32 0.0, %v1491
        %v1493 = vpop.f32.mrb[0].mxu0
        %v1494 = vpop.f32.mrb[0].mxu0
        %v1495 = vpop.f32.mrb[0].mxu0
        %1496 = vdwg.mxu0
        %v1497 = vpack.c.bf16 %v1492, %v1444
        %1499 = vrot.lane.b32.xlu0 %v1497, 24
        %v1500 = vpop.permute.xlu0 %1499
        %vm1502 = vcmask 261312
        %1503 = vst.msk [vmem:[#allocation2] sm:$0xff] %vm1502, %v1500
        %v1504 = vmul.f32 %v1397, 0.25
        %v1505 = vmul.f32 %v1398, 0.25
        %1506 = vst.msk [vmem:[%s502] sm:$0xff] %vm588, %v1504
        %1507 = vst.msk [vmem:[%s502 + $0x8] sm:$0xff] %vm588, %v1505
        %v1508 = vld [vmem:[#allocation2] sm:$0xff]
        %v1509 = vld [vmem:[#allocation3] sm:$0xf]
        %v1510 = vld [vmem:[#allocation3 + $0x4] sm:$0xf]
        %v1511 = vld [vmem:[#allocation3 + $0x8] sm:$0xf]
        %v1512 = vld [vmem:[#allocation3 + $0xc] sm:$0xf]
        %v1513 = vld [vmem:[%s4] sm:$0x1]
        %v1515 = vlaneseq
        %v1516 = vshrl.u32 %v1515, 7
        %v1517 = vsub.s32 0, %v1516
        %v1518 = vrot.slane %v1513, %v1517
        %v1524 = vunpack.c.l.b16 %v1509
        %v1525 = vunpack.c.l.b16 %v1510
        %v1526 = vunpack.c.l.b16 %v1511
        %v1527 = vunpack.c.l.b16 %v1512
        %v1528 = vpack.c.b16 %v1525, %v1524
        %v1529 = vpack.c.b16 %v1527, %v1526
        %v1533 = vsel %vm538, %v1508, 0
        %1535 = vmatprep.subr.bf16.mxu0 0
        %1536 = vmatpush1.bf16.msra.mxu0 %v1528
        %1537 = vmatprep.subr.bf16.mxu0 0
        %1538 = vmatpush1.bf16.msra.mxu0 %v1529
        %1539 = vmatprep.subr.bf16.mxu0 0
        %1540 = vmatpush1.bf16.msra.mxu0 0
        %1541 = vmatprep.subr.bf16.mxu0 0
        %1542 = vmatpush1.bf16.msra.mxu0 0
        %1543 = vmatprep.subr.bf16.mxu0 0
        %1544 = vmatpush1.bf16.msra.mxu0 0
        %1545 = vmatprep.subr.bf16.mxu0 0
        %1546 = vmatpush1.bf16.msra.mxu0 0
        %1547 = vmatprep.subr.bf16.mxu0 0
        %1548 = vmatpush1.bf16.msra.mxu0 0
        %1549 = vmatprep.subr.bf16.mxu0 0
        %1550 = vmatpush1.bf16.msra.mxu0 0
        %1551 = vmatprep.subr.bf16.mxu0 0
        %1552 = vmatpush1.bf16.msra.mxu0 0
        %1553 = vmatprep.subr.bf16.mxu0 0
        %1554 = vmatpush1.bf16.msra.mxu0 0
        %1555 = vmatprep.subr.bf16.mxu0 0
        %1556 = vmatpush1.bf16.msra.mxu0 0
        %1557 = vmatprep.subr.bf16.mxu0 0
        %1558 = vmatpush1.bf16.msra.mxu0 0
        %1559 = vmatprep.subr.bf16.mxu0 0
        %1560 = vmatpush1.bf16.msra.mxu0 0
        %1561 = vmatprep.subr.bf16.mxu0 0
        %1562 = vmatpush1.bf16.msra.mxu0 0
        %1563 = vmatprep.subr.bf16.mxu0 0
        %1564 = vmatpush1.bf16.msra.mxu0 0
        %1565 = vmatprep.subr.bf16.mxu0 0
        %1566 = vmatpush1.bf16.msra.mxu0 0
        %1567 = vmatprep.mubr.bf16.mxu0 0
        %1568 = vmatmul.mubr.bf16.gmra.mrb[0].mxu0 %v1533
        %v1569 = vpop.f32.mrb[0].mxu0
        %v1570 = vadd.f32 %v1518, %v1569
        %v1571 = vpop.f32.mrb[0].mxu0
        %v1572 = vpop.f32.mrb[0].mxu0
        %v1573 = vadd.f32 %v1518, %v1572
        %v1574 = vpop.f32.mrb[0].mxu0
        %1575 = vdwg.mxu0
        %v1576 = vadd.f32 %v512, %v1570
        %v1577 = vadd.f32 %v513, %v1573
        %v1578 = vld [vmem:[%s5] sm:$0x1]
        %v1579 = vld [vmem:[%s6] sm:$0x1]
        %v1580 = vsel %vm538, %v1576, 0.0
        %1581 = vadd.xlane.f32.xlu0 %v1580
        %v1582 = vpop.xlane.xlu0 %1581
        %v1583 = vsel %vm538, %v1577, 0.0
        %1584 = vadd.xlane.f32.xlu0 %v1583
        %v1585 = vpop.xlane.xlu0 %1584
        %v1586 = vrcp.pop 32.0
        %v1587 = vmul.f32 %v1582, %v1586
        %v1588 = vmul.f32 %v1585, %v1586
        %v1589 = vsub.f32 %v1576, %v1587
        %v1590 = vsub.f32 %v1577, %v1588
        %v1591 = vmul.f32 %v1589, %v1589
        %v1592 = vmul.f32 %v1590, %v1590
        %v1593 = vsel %vm538, %v1591, 0.0
        %1594 = vadd.xlane.f32.xlu0 %v1593
        %v1595 = vpop.xlane.xlu0 %1594
        %v1596 = vsel %vm538, %v1592, 0.0
        %1597 = vadd.xlane.f32.xlu0 %v1596
        %v1598 = vpop.xlane.xlu0 %1597
        %v1599 = vmul.f32 %v1595, %v1586
        %v1600 = vmul.f32 %v1598, %v1586
        %v1601 = vadd.f32 %v1599, 1e-05
        %v1602 = vadd.f32 %v1600, 1e-05
        %v1603 = vrsqrt.pop %v1601
        %v1604 = vrsqrt.pop %v1602
        %v1605 = vmul.f32 %v1589, %v1603
        %v1606 = vmul.f32 %v1590, %v1604
        %v1608 = vlaneseq
        %v1609 = vshrl.u32 %v1608, 7
        %v1610 = vsub.s32 0, %v1609
        %v1611 = vrot.slane %v1578, %v1610
        %v1613 = vmul.f32 %v1605, %v1611
        %v1614 = vmul.f32 %v1606, %v1611
        %v1616 = vlaneseq
        %v1617 = vshrl.u32 %v1616, 7
        %v1618 = vsub.s32 0, %v1617
        %v1619 = vrot.slane %v1579, %v1618
        %v1621 = vadd.f32 %v1613, %v1619
        %v1622 = vadd.f32 %v1614, %v1619
        %v1623 = vpack.c.bf16 %v1622, %v1621
        %v1624 = vld [vmem:[#allocation6] sm:$0xf]
        %v1625 = vld [vmem:[#allocation6 + $0x4] sm:$0xf]
        %v1626 = vld [vmem:[#allocation6 + $0x8] sm:$0xf]
        %v1627 = vld [vmem:[#allocation6 + $0xc] sm:$0xf]
        %v1628 = vld [vmem:[%s8] sm:$0x1]
        %v1630 = vlaneseq
        %v1631 = vshrl.u32 %v1630, 7
        %v1632 = vsub.s32 0, %v1631
        %v1633 = vrot.slane %v1628, %v1632
        %v1639 = vunpack.c.l.b16 %v1624
        %v1640 = vunpack.c.l.b16 %v1625
        %v1641 = vunpack.c.l.b16 %v1626
        %v1642 = vunpack.c.l.b16 %v1627
        %v1643 = vpack.c.b16 %v1640, %v1639
        %v1644 = vpack.c.b16 %v1642, %v1641
        %v1648 = vsel %vm538, %v1623, 0
        %1650 = vmatprep.subr.bf16.mxu0 0
        %1651 = vmatpush1.bf16.msra.mxu0 %v1643
        %1652 = vmatprep.subr.bf16.mxu0 0
        %1653 = vmatpush1.bf16.msra.mxu0 %v1644
        %1654 = vmatprep.subr.bf16.mxu0 0
        %1655 = vmatpush1.bf16.msra.mxu0 0
        %1656 = vmatprep.subr.bf16.mxu0 0
        %1657 = vmatpush1.bf16.msra.mxu0 0
        %1658 = vmatprep.subr.bf16.mxu0 0
        %1659 = vmatpush1.bf16.msra.mxu0 0
        %1660 = vmatprep.subr.bf16.mxu0 0
        %1661 = vmatpush1.bf16.msra.mxu0 0
        %1662 = vmatprep.subr.bf16.mxu0 0
        %1663 = vmatpush1.bf16.msra.mxu0 0
        %1664 = vmatprep.subr.bf16.mxu0 0
        %1665 = vmatpush1.bf16.msra.mxu0 0
        %1666 = vmatprep.subr.bf16.mxu0 0
        %1667 = vmatpush1.bf16.msra.mxu0 0
        %1668 = vmatprep.subr.bf16.mxu0 0
        %1669 = vmatpush1.bf16.msra.mxu0 0
        %1670 = vmatprep.subr.bf16.mxu0 0
        %1671 = vmatpush1.bf16.msra.mxu0 0
        %1672 = vmatprep.subr.bf16.mxu0 0
        %1673 = vmatpush1.bf16.msra.mxu0 0
        %1674 = vmatprep.subr.bf16.mxu0 0
        %1675 = vmatpush1.bf16.msra.mxu0 0
        %1676 = vmatprep.subr.bf16.mxu0 0
        %1677 = vmatpush1.bf16.msra.mxu0 0
        %1678 = vmatprep.subr.bf16.mxu0 0
        %1679 = vmatpush1.bf16.msra.mxu0 0
        %1680 = vmatprep.subr.bf16.mxu0 0
        %1681 = vmatpush1.bf16.msra.mxu0 0
        %1682 = vmatprep.mubr.bf16.mxu0 0
        %1683 = vmatmul.mubr.bf16.gmra.mrb[0].mxu0 %v1648
        %v1684 = vpop.f32.mrb[0].mxu0
        %v1685 = vadd.f32 %v1633, %v1684
        %v1686 = vpop.f32.mrb[0].mxu0
        %v1687 = vpop.f32.mrb[0].mxu0
        %v1688 = vadd.f32 %v1633, %v1687
        %v1689 = vpop.f32.mrb[0].mxu0
        %1690 = vdwg.mxu0
        %v1691 = vmax.f32 %v1685, 0.0
        %v1692 = vmax.f32 %v1688, 0.0
        %v1693 = vpack.c.bf16 %v1692, %v1691
        %v1694 = vld [vmem:[%s9] sm:$0xf]
        %v1695 = vld [vmem:[%s9 + $0x4] sm:$0xf]
        %v1696 = vld [vmem:[%s9 + $0x8] sm:$0xf]
        %v1697 = vld [vmem:[%s9 + $0xc] sm:$0xf]
        %v1698 = vld [vmem:[%s9 + $0x10] sm:$0xf]
        %v1699 = vld [vmem:[%s9 + $0x14] sm:$0xf]
        %v1700 = vld [vmem:[%s9 + $0x18] sm:$0xf]
        %v1701 = vld [vmem:[%s9 + $0x1c] sm:$0xf]
        %v1702 = vld [vmem:[%s10] sm:$0x1]
        %v1704 = vlaneseq
        %v1705 = vshrl.u32 %v1704, 7
        %v1706 = vsub.s32 0, %v1705
        %v1707 = vrot.slane %v1702, %v1706
        %v1717 = vunpack.c.l.b16 %v1694
        %v1718 = vunpack.c.l.b16 %v1695
        %v1719 = vunpack.c.l.b16 %v1696
        %v1720 = vunpack.c.l.b16 %v1697
        %v1721 = vunpack.c.l.b16 %v1698
        %v1722 = vunpack.c.l.b16 %v1699
        %v1723 = vunpack.c.l.b16 %v1700
        %v1724 = vunpack.c.l.b16 %v1701
        %v1725 = vpack.c.b16 %v1718, %v1717
        %v1726 = vpack.c.b16 %v1720, %v1719
        %v1727 = vpack.c.b16 %v1722, %v1721
        %v1728 = vpack.c.b16 %v1724, %v1723
        %vm1733 = vcmask 523264
        %v1735 = vsel %vm1733, %v1693, 0
        %1737 = vmatprep.subr.bf16.mxu0 0
        %1738 = vmatpush1.bf16.msra.mxu0 %v1725
        %1739 = vmatprep.subr.bf16.mxu0 0
        %1740 = vmatpush1.bf16.msra.mxu0 %v1726
        %1741 = vmatprep.subr.bf16.mxu0 0
        %1742 = vmatpush1.bf16.msra.mxu0 %v1727
        %1743 = vmatprep.subr.bf16.mxu0 0
        %1744 = vmatpush1.bf16.msra.mxu0 %v1728
        %1745 = vmatprep.subr.bf16.mxu0 0
        %1746 = vmatpush1.bf16.msra.mxu0 0
        %1747 = vmatprep.subr.bf16.mxu0 0
        %1748 = vmatpush1.bf16.msra.mxu0 0
        %1749 = vmatprep.subr.bf16.mxu0 0
        %1750 = vmatpush1.bf16.msra.mxu0 0
        %1751 = vmatprep.subr.bf16.mxu0 0
        %1752 = vmatpush1.bf16.msra.mxu0 0
        %1753 = vmatprep.subr.bf16.mxu0 0
        %1754 = vmatpush1.bf16.msra.mxu0 0
        %1755 = vmatprep.subr.bf16.mxu0 0
        %1756 = vmatpush1.bf16.msra.mxu0 0
        %1757 = vmatprep.subr.bf16.mxu0 0
        %1758 = vmatpush1.bf16.msra.mxu0 0
        %1759 = vmatprep.subr.bf16.mxu0 0
        %1760 = vmatpush1.bf16.msra.mxu0 0
        %1761 = vmatprep.subr.bf16.mxu0 0
        %1762 = vmatpush1.bf16.msra.mxu0 0
        %1763 = vmatprep.subr.bf16.mxu0 0
        %1764 = vmatpush1.bf16.msra.mxu0 0
        %1765 = vmatprep.subr.bf16.mxu0 0
        %1766 = vmatpush1.bf16.msra.mxu0 0
        %1767 = vmatprep.subr.bf16.mxu0 0
        %1768 = vmatpush1.bf16.msra.mxu0 0
        %1769 = vmatprep.mubr.bf16.mxu0 0
        %1770 = vmatmul.mubr.bf16.gmra.mrb[0].mxu0 %v1735
        %v1771 = vpop.f32.mrb[0].mxu0
        %v1772 = vadd.f32 %v1707, %v1771
        %v1773 = vpop.f32.mrb[0].mxu0
        %v1774 = vpop.f32.mrb[0].mxu0
        %v1775 = vadd.f32 %v1707, %v1774
        %v1776 = vpop.f32.mrb[0].mxu0
        %1777 = vdwg.mxu0
        %v1778 = vadd.f32 %v1621, %v1772
        %v1779 = vadd.f32 %v1622, %v1775
        %v1780 = vld [vmem:[%s11] sm:$0x1]
        %v1781 = vld [vmem:[%s12] sm:$0x1]
        %v1782 = vsel %vm538, %v1778, 0.0
        %1783 = vadd.xlane.f32.xlu0 %v1782
        %v1784 = vpop.xlane.xlu0 %1783
        %v1785 = vsel %vm538, %v1779, 0.0
        %1786 = vadd.xlane.f32.xlu0 %v1785
        %v1787 = vpop.xlane.xlu0 %1786
        %v1788 = vmul.f32 %v1784, %v1586
        %v1789 = vmul.f32 %v1787, %v1586
        %v1790 = vsub.f32 %v1778, %v1788
        %v1791 = vsub.f32 %v1779, %v1789
        %v1792 = vmul.f32 %v1790, %v1790
        %v1793 = vmul.f32 %v1791, %v1791
        %v1794 = vsel %vm538, %v1792, 0.0
        %1795 = vadd.xlane.f32.xlu0 %v1794
        %v1796 = vpop.xlane.xlu0 %1795
        %v1797 = vsel %vm538, %v1793, 0.0
        %1798 = vadd.xlane.f32.xlu0 %v1797
        %v1799 = vpop.xlane.xlu0 %1798
        %v1800 = vmul.f32 %v1796, %v1586
        %v1801 = vmul.f32 %v1799, %v1586
        %v1802 = vadd.f32 %v1800, 1e-05
        %v1803 = vadd.f32 %v1801, 1e-05
        %v1804 = vrsqrt.pop %v1802
        %v1805 = vrsqrt.pop %v1803
        %v1806 = vmul.f32 %v1790, %v1804
        %v1807 = vmul.f32 %v1791, %v1805
        %v1809 = vlaneseq
        %v1810 = vshrl.u32 %v1809, 7
        %v1811 = vsub.s32 0, %v1810
        %v1812 = vrot.slane %v1780, %v1811
        %v1814 = vmul.f32 %v1806, %v1812
        %v1815 = vmul.f32 %v1807, %v1812
        %v1817 = vlaneseq
        %v1818 = vshrl.u32 %v1817, 7
        %v1819 = vsub.s32 0, %v1818
        %v1820 = vrot.slane %v1781, %v1819
        %v1822 = vadd.f32 %v1814, %v1820
        %v1823 = vadd.f32 %v1815, %v1820
        %1824 = vst.msk [vmem:[%s495] sm:$0xff] %vm538, %v1822
        %1825 = vst.msk [vmem:[%s495 + $0x8] sm:$0xff] %vm538, %v1823
        %s1826 = sand.u32 %s320, 1
        %s1827 = scalar_lea.sflag [#allocation5], %s1826
        %s1828 = sand.u32 %s320, 1
        %s1829 = smul.addr %s1828, 16
        %s1830 = scalar_lea.vmem [#allocation8], %s1829
        %s1831 = sand.u32 %s346, 1
        %s1832 = scalar_lea.sflag [#allocation10], %s1831
        %s1833 = sand.u32 %s346, 1
        %s1834 = smul.addr %s1833, 16
        %s1835 = scalar_lea.vmem [#allocation9], %s1834
        // Predicated region
        $region81: #{tpu_custom_call.1} parent=71 // pred_check
          %p1836 = pneg %p330
        $region82: #{tpu_custom_call.1} parent=71 // pred_check_branch
          %1838 = sbr.rel (%p1836) target = $region84
        $region83: #{tpu_custom_call.1} parent=71 // pred_region
          %s1839 = smul.u32 2, %s34
          %s1841 = ssub.s32 256, 256
          %1842 = vsyncadd %s1827, %s1841
          %s1843 = smul.addr %s1839, 128
          %s1844 = scalar_lea.hbm %s13, %s1843
          %s1845 = sshll.u32 %s1830, 4
          %s1846 = int_to_ptr.vmem [resolvable:$true] %s1845
          %1851 = dma.vmem_to_hbm [thread:$0]  %s1846, 256, %s1844, %s1827, 128, 128, 8
        $region84: #{tpu_custom_call.1} parent=71 // pred_fallthru
          _
        // Predicated region
        $region85: #{tpu_custom_call.1} parent=71 // pred_check
          %p1852 = pneg %p356
        $region86: #{tpu_custom_call.1} parent=71 // pred_check_branch
          %1854 = sbr.rel (%p1852) target = $region88
        $region87: #{tpu_custom_call.1} parent=71 // pred_region
          %s1855 = smul.u32 2, %s34
          %s1857 = ssub.s32 256, 256
          %1858 = vsyncadd %s1832, %s1857
          %s1859 = smul.addr %s1855, 128
          %s1860 = scalar_lea.hbm %s14, %s1859
          %s1861 = sshll.u32 %s1835, 4
          %s1862 = int_to_ptr.vmem [resolvable:$true] %s1861
          %1867 = dma.vmem_to_hbm [thread:$0]  %s1862, 256, %s1860, %s1832, 128, 128, 8
        $region88: #{tpu_custom_call.1} parent=71 // pred_fallthru
          _
      $region72: #{tpu_custom_call.1} parent=5 // pred_fallthru
        _
      %p1868 = scmp.le.s32.totalorder 2, %s29
      // Predicated region
      $region89: #{tpu_custom_call.1} parent=5 // pred_check
        %p1869 = pneg %p1868
      $region90: #{tpu_custom_call.1} parent=5 // pred_check_branch
        %1871 = sbr.rel (%p1869) target = $region92
      $region91: #{tpu_custom_call.1} parent=5 // pred_region
        %s1872 = ssub.s32 %s29, 2
        // Predicated region
        $region93: #{tpu_custom_call.1} parent=91 // pred_check
          %p1873 = pneg %p336
        $region94: #{tpu_custom_call.1} parent=91 // pred_check_branch
          %1875 = sbr.rel (%p1873) target = $region96
        $region95: #{tpu_custom_call.1} parent=91 // pred_region
          %s1876 = sand.u32 %s321, 1
          %s1877 = scalar_lea.sflag [#allocation5], %s1876
          %s1878 = sand.u32 %s321, 1
          %s1879 = smul.addr %s1878, 16
          %s1880 = scalar_lea.vmem [#allocation8], %s1879
          %1881 = dma.done %s1877, 256
        $region96: #{tpu_custom_call.1} parent=91 // pred_fallthru
          _
        // Predicated region
        $region97: #{tpu_custom_call.1} parent=91 // pred_check
          %p1882 = pneg %p362
        $region98: #{tpu_custom_call.1} parent=91 // pred_check_branch
          %1884 = sbr.rel (%p1882) target = $region100
        $region99: #{tpu_custom_call.1} parent=91 // pred_region
          %s1885 = sand.u32 %s347, 1
          %s1886 = scalar_lea.sflag [#allocation10], %s1885
          %s1887 = sand.u32 %s347, 1
          %s1888 = smul.addr %s1887, 16
          %s1889 = scalar_lea.vmem [#allocation9], %s1888
          %1890 = dma.done %s1886, 256
        $region100: #{tpu_custom_call.1} parent=91 // pred_fallthru
          _
      $region92: #{tpu_custom_call.1} parent=5 // pred_fallthru
        _
    $region6: #{tpu_custom_call.1} parent=1 // loop_footer
      %s33 = sadd.s32 1, %s29
    $region7: #{tpu_custom_call.1} parent=1 // loop_footer_branch
      %28 = sbr.rel target = $region3
    $region8: #{tpu_custom_call.1} parent=1 // loop_exit
      _
    %1891 = vsyncpa [#allocation4], 1
    %s1892 = scalar_lea.sflag [#allocation4], 1
    %1893 = vsyncpa %s1892, 1
    %1894 = vsyncpa [#allocation7], 1
    %1895 = vsyncpa [#allocation5], 1
    %s1896 = scalar_lea.sflag [#allocation5], 1
    %1897 = vsyncpa %s1896, 1
    %1898 = vsyncpa [#allocation10], 1
    %s1899 = scalar_lea.sflag [#allocation10], 1
    %1900 = vsyncpa %s1899, 1

</llo_original>
